<compile_context>
chip_gen: v7x
topology: tpu7x:2x2x1
jax: 0.10.0
libtpu: 0.0.40
codegen_flags: <defaults>
</compile_context>

<pallas_src>
import jax
import jax.numpy as jnp
from jax.experimental import pallas as pl
from jax.experimental.pallas import tpu as pltpu

LN_EPS = 1e-12


def _output_kernel(x_ref, w_ref, b_ref, res_ref, gamma_ref, beta_ref,
                   o_ref, acc_ref):
    k = pl.program_id(1)

    @pl.when(k == 0)
    def _():
        acc_ref[...] = jnp.zeros_like(acc_ref)

    # Partial dense: [TM, TK] @ [TK, H] on the MXU, f32 accumulation in VMEM.
    acc_ref[...] += jnp.dot(x_ref[...], w_ref[...],
                            preferred_element_type=jnp.float32)

    @pl.when(k == pl.num_programs(1) - 1)
    def _():
        # Bias + dropout(eval)=identity + residual add, all in f32.
        y = (acc_ref[...]
             + b_ref[...].astype(jnp.float32)
             + res_ref[...].astype(jnp.float32))

        # Two-pass (centered) LayerNorm statistics in f32 (numerically matches
        # torch's LayerNorm better than E[y^2]-E[y]^2).
        inv_h = jnp.float32(1.0 / y.shape[-1])
        mean = jnp.sum(y, axis=-1, keepdims=True) * inv_h
        yc = y - mean
        var = jnp.sum(yc * yc, axis=-1, keepdims=True) * inv_h
        inv = jax.lax.rsqrt(var + jnp.float32(LN_EPS))     # EUP slot

        out = (yc * inv * gamma_ref[...].astype(jnp.float32)
               + beta_ref[...].astype(jnp.float32))
        o_ref[...] = out.astype(o_ref.dtype)


def _vmem_capacity_bytes():
    try:
        return int(pltpu.get_tpu_info().vmem_capacity_bytes)
    except Exception:
        return 64 * 1024 * 1024      # conservative fallback (v7x per-TC)


def _choose_tk(I, H, w_it, budget):
    """K-tile size: full I (resident weight) if it fits comfortably, otherwise
    the largest MXU-friendly divisor of I whose double-buffered tile fits."""
    if I * H * w_it <= budget // 3:
        return I
    per_k_cost = 2 * H * w_it                       # double-buffered bytes / K row
    limit = max(budget // 3, 128 * per_k_cost)
    for align in (256, 128):                        # MXU native dims v6e/v7x, v5e
        if I % align:
            continue
        tk = min(I, (limit // per_k_cost) // align * align)
        while tk >= align and I % tk:
            tk -= align
        if tk >= align:
            return tk
    return I   # no clean divisor of I: keep resident, shrink row tile instead


def output_forward(hidden_states, input_tensor, weight_ih, bias, gamma, beta,
                   *, block_rows=None, block_k=None, mxu_bf16=False):
    """Output.forward (eval mode).

    hidden_states: [S, B, I]; input_tensor: [S, B, H]
    weight_ih:     [I, H]   (nn.Linear weight pre-transposed once at load time)
    bias/gamma/beta: [H]
    returns:       [S, B, H] in hidden_states.dtype
    """
    S, B, I = hidden_states.shape
    H = input_tensor.shape[-1]
    rows = S * B
    out_dtype = hidden_states.dtype

    x2d = hidden_states.reshape(rows, I)
    res2d = input_tensor.reshape(rows, H)
    w = weight_ih
    if mxu_bf16 and x2d.dtype == jnp.float32:
        # Native bf16 MXU operands (f32 accumulation preserved in-kernel).
        x2d = x2d.astype(jnp.bfloat16)
        w = w.astype(jnp.bfloat16)
    b2d = bias.reshape(1, H)
    g2d = gamma.reshape(1, H)
    bt2d = beta.reshape(1, H)

    x_it = x2d.dtype.itemsize
    w_it = w.dtype.itemsize
    res_it = res2d.dtype.itemsize
    out_it = jnp.dtype(out_dtype).itemsize

    # ---------------- VMEM budget (generation aware) ---------------------
    vmem_cap = _vmem_capacity_bytes()          # 128 MiB v5e/v6e, 64 MiB v7x
    budget = int(vmem_cap * 0.78)              # sizing budget
    limit_cap = int(vmem_cap * 0.90)           # never request full physical VMEM

    # ---------------- K (intermediate dim) tiling -------------------------
    if block_k is None:
        block_k = _choose_tk(I, H, w_it, budget)
    if block_k <= 0 or I % block_k:
        block_k = I                            # only K-tile on an even split
    num_k = I // block_k

    # ---------------- row-tile size ---------------------------------------
    sub = 8 if x_it >= 4 else 16               # sublane packing (f32 / bf16)

    def vmem_est(tm, tk, nk):
        w_buf = 1 if nk == 1 else 2            # resident weight single-buffered
        return (2 * tm * tk * x_it             # x tile (double-buffered)
                + w_buf * tk * H * w_it        # weight tile
                + 2 * tm * H * res_it          # residual tile
                + 2 * tm * H * out_it          # output tile
                + tm * H * 4                   # f32 accumulator scratch
                + 3 * H * 4)                   # bias / gamma / beta

    if block_rows is None:
        block_rows = 512 if x_it >= 4 else 1024
    block_rows = min(block_rows, rows)
    if rows >= 2 * sub:
        # >= 2 row tiles: enables megacore split + prefetch/writeback overlap.
        block_rows = min(block_rows, max(sub, (rows // 2) // sub * sub))
    if block_rows < rows:
        block_rows = max(sub, (block_rows // sub) * sub)
    while block_rows > sub and vmem_est(block_rows, block_k, num_k) > budget:
        block_rows = max(sub, (block_rows // 2 // sub) * sub)
    if 0 < block_rows < rows and rows % block_rows:
        # Prefer a tile that divides rows evenly (no padded remainder tile),
        # but don't shrink below half the chosen tile.
        br = (block_rows // sub) * sub
        while br >= sub and rows % br:
            br -= sub
        if br >= max(sub, block_rows // 2):
            block_rows = br

    grid = (pl.cdiv(rows, block_rows), num_k)
    est = vmem_est(block_rows, block_k, num_k)
    vmem_limit = int(min(limit_cap, max(32 * 1024 * 1024, 2 * est)))

    cost = pl.CostEstimate(
        flops=2 * rows * I * H,
        transcendentals=0,
        bytes_accessed=(rows * I * x_it + I * H * w_it
                        + rows * H * res_it + rows * H * out_it
                        + 3 * H * 4),
    )

    def _call(single_buffer_resident):
        def const_spec(shape, index_map):
            if single_buffer_resident:
                return pl.BlockSpec(shape, index_map,
                                    pipeline_mode=pl.Buffered(1))
            return pl.BlockSpec(shape, index_map)

        # weight: resident (single-buffered) when not K-tiled, else streamed.
        if num_k == 1:
            w_spec = const_spec((block_k, H), lambda i, k: (k, 0))
        else:
            w_spec = pl.BlockSpec((block_k, H), lambda i, k: (k, 0))

        in_specs = [
            pl.BlockSpec((block_rows, block_k), lambda i, k: (i, k)),   # x
            w_spec,                                                     # weight
            const_spec((1, H), lambda i, k: (0, 0)),                    # bias
            pl.BlockSpec((block_rows, H), lambda i, k: (i, 0)),         # residual
            const_spec((1, H), lambda i, k: (0, 0)),                    # gamma
            const_spec((1, H), lambda i, k: (0, 0)),                    # beta
        ]
        out_spec = pl.BlockSpec((block_rows, H), lambda i, k: (i, 0))

        return pl.pallas_call(
            _output_kernel,
            out_shape=jax.ShapeDtypeStruct((rows, H), out_dtype),
            grid_spec=pltpu.PrefetchScalarGridSpec(
                num_scalar_prefetch=0,
                grid=grid,
                in_specs=in_specs,
                out_specs=out_spec,
                scratch_shapes=[pltpu.VMEM((block_rows, H), jnp.float32)],
            ),
            compiler_params=pltpu.CompilerParams(
                dimension_semantics=("parallel", "arbitrary"),
                vmem_limit_bytes=vmem_limit,
            ),
            cost_estimate=cost,
        )(x2d, w, b2d, res2d, g2d, bt2d)

    try:
        out2d = _call(True)
    except Exception:
        # pipeline_mode=pl.Buffered(1) unsupported on this build: plain specs.
        out2d = _call(False)

    return out2d.reshape(S, B, H)


if __name__ == "__main__":
    # Small config; H is a multiple of 128 so output stores are lane-dense.
    src_len, batch = 8, 4
    intermediate_size, hidden_size = 256, 128

    key = jax.random.PRNGKey(0)
    k_x, k_res, k_w, k_b = jax.random.split(key, 4)

    hidden_states = jax.random.normal(
        k_x, (src_len, batch, intermediate_size), dtype=jnp.float32)
    input_tensor = jax.random.normal(
        k_res, (src_len, batch, hidden_size), dtype=jnp.float32)

    # torch nn.Linear layout [H, I]; LayerNorm affine = (1, 0).
    weight = 0.02 * jax.random.normal(
        k_w, (hidden_size, intermediate_size), dtype=jnp.float32)
    bias = 0.02 * jax.random.normal(k_b, (hidden_size,), dtype=jnp.float32)
    gamma = jnp.ones((hidden_size,), dtype=jnp.float32)
    beta = jnp.zeros((hidden_size,), dtype=jnp.float32)

    # Hoist the [H, I] -> [I, H] transpose to parameter-load time.
    weight_ih = jnp.asarray(weight.T)

    # Pure-JAX reference (eval-mode dropout = identity).
    ref_h = hidden_states.reshape(-1, intermediate_size) @ weight_ih + bias
    ref_y = ref_h + input_tensor.reshape(-1, hidden_size)
    mu = ref_y.mean(-1, keepdims=True)
    var = ((ref_y - mu) ** 2).mean(-1, keepdims=True)
    ref = ((ref_y - mu) / jnp.sqrt(var + LN_EPS) * gamma + beta).reshape(
        src_len, batch, hidden_size)

    # 1) f32 run; block_rows=16 forces a 2-step row grid (pipelined, megacore).
    out = output_forward(hidden_states, input_tensor, weight_ih, bias, gamma,
                         beta, block_rows=16)
    out = jax.block_until_ready(out)
    assert jnp.allclose(out, ref, atol=1e-5, rtol=1e-5), \
        float(jnp.max(jnp.abs(out - ref)))

    # 2) f32 with forced K tiling (block_k=128 -> 2 K steps) to exercise the
    #    accumulator + pl.when finalize path used for large weights.
    out_kt = output_forward(hidden_states, input_tensor, weight_ih, bias,
                            gamma, beta, block_rows=16, block_k=128)
    out_kt = jax.block_until_ready(out_kt)
    assert jnp.allclose(out_kt, ref, atol=1e-5, rtol=1e-5), \
        float(jnp.max(jnp.abs(out_kt - ref)))

    # 3) bf16 run: native bf16 MXU operands, f32 accumulation + f32 LayerNorm.
    out_bf16 = output_forward(hidden_states.astype(jnp.bfloat16),
                              input_tensor.astype(jnp.bfloat16),
                              weight_ih.astype(jnp.bfloat16),
                              bias, gamma, beta, block_rows=16)
    out_bf16 = jax.block_until_ready(out_bf16)
    assert jnp.allclose(out_bf16.astype(jnp.float32), ref,
                        atol=1.5e-1, rtol=5e-2)

    print("KERNEL_OK")
</pallas_src>

<mosaic_0001>
module attributes {stable_mosaic.version = 11 : i64} {
  func.func @_output_kernel(%arg0: i32, %arg1: i32, %arg2: memref<16x256xf32, #tpu.memory_space<vmem>>, %arg3: memref<256x128xf32, #tpu.memory_space<vmem>>, %arg4: memref<1x128xf32, #tpu.memory_space<vmem>>, %arg5: memref<16x128xf32, #tpu.memory_space<vmem>>, %arg6: memref<1x128xf32, #tpu.memory_space<vmem>>, %arg7: memref<1x128xf32, #tpu.memory_space<vmem>>, %arg8: memref<16x128xf32, #tpu.memory_space<vmem>>, %arg9: memref<16x128xf32, #tpu.memory_space<vmem>>) attributes {dimension_semantics = [#tpu.dimension_semantics<parallel>, #tpu.dimension_semantics<arbitrary>], iteration_bounds = array<i64: 2, 1>, scalar_prefetch = 0 : i64, scratch_operands = 1 : i64, tpu.core_type = #tpu.core_type<tc>, window_params = [{transform_indices = @transform_0, window_bounds = array<i64: 16, 256>}, {pipeline_mode = #tpu.pipeline_mode<synchronous>, transform_indices = @transform_1, window_bounds = array<i64: 256, 128>}, {pipeline_mode = #tpu.pipeline_mode<synchronous>, transform_indices = @transform_2, window_bounds = array<i64: 1, 128>}, {transform_indices = @transform_3, window_bounds = array<i64: 16, 128>}, {pipeline_mode = #tpu.pipeline_mode<synchronous>, transform_indices = @transform_4, window_bounds = array<i64: 1, 128>}, {pipeline_mode = #tpu.pipeline_mode<synchronous>, transform_indices = @transform_5, window_bounds = array<i64: 1, 128>}, {transform_indices = @transform_6, window_bounds = array<i64: 16, 128>}]} {
    %c0_i32 = arith.constant 0 : i32
    %0 = arith.cmpi eq, %arg1, %c0_i32 : i32
    %1 = arith.extui %0 : i1 to i32
    %c0_i32_0 = arith.constant 0 : i32
    %2 = arith.cmpi ne, %1, %c0_i32_0 : i32
    scf.if %2 {
      %cst_10 = arith.constant 0.000000e+00 : f32
      %12 = vector.broadcast %cst_10 : f32 to vector<16x128xf32>
      %c0_11 = arith.constant 0 : index
      %c0_12 = arith.constant 0 : index
      %13 = vector.load %arg9[%c0_11, %c0_12] : memref<16x128xf32, #tpu.memory_space<vmem>>, vector<16x128xf32>
      tpu.vector_store %arg9[%c0_11, %c0_12], %12 {strides = array<i32>} : memref<16x128xf32, #tpu.memory_space<vmem>>, vector<16x128xf32>,
    } else {
    }
    %c0 = arith.constant 0 : index
    %c0_1 = arith.constant 0 : index
    %3 = vector.load %arg9[%c0, %c0_1] : memref<16x128xf32, #tpu.memory_space<vmem>>, vector<16x128xf32>
    %c0_2 = arith.constant 0 : index
    %c0_3 = arith.constant 0 : index
    %4 = vector.load %arg2[%c0_2, %c0_3] : memref<16x256xf32, #tpu.memory_space<vmem>>, vector<16x256xf32>
    %c0_4 = arith.constant 0 : index
    %c0_5 = arith.constant 0 : index
    %5 = vector.load %arg3[%c0_4, %c0_5] : memref<256x128xf32, #tpu.memory_space<vmem>>, vector<256x128xf32>
    %cst = arith.constant dense<0.000000e+00> : vector<16x128xf32>
    %6 = tpu.matmul %4, %5, %cst {dimension_numbers = #tpu.dot_dimension_numbers<[1], [0], [0], [1], [0, 0, 1, 1], [], []>} : vector<16x256xf32>, vector<256x128xf32>, vector<16x128xf32> -> vector<16x128xf32>
    %7 = arith.addf %3, %6 : vector<16x128xf32>
    %c0_6 = arith.constant 0 : index
    %c0_7 = arith.constant 0 : index
    %8 = vector.load %arg9[%c0_6, %c0_7] : memref<16x128xf32, #tpu.memory_space<vmem>>, vector<16x128xf32>
    tpu.vector_store %arg9[%c0_6, %c0_7], %7 {strides = array<i32>} : memref<16x128xf32, #tpu.memory_space<vmem>>, vector<16x128xf32>,
    %c0_i32_8 = arith.constant 0 : i32
    %9 = arith.cmpi eq, %arg1, %c0_i32_8 : i32
    %10 = arith.extui %9 : i1 to i32
    %c0_i32_9 = arith.constant 0 : i32
    %11 = arith.cmpi ne, %10, %c0_i32_9 : i32
    scf.if %11 {
      %c0_10 = arith.constant 0 : index
      %c0_11 = arith.constant 0 : index
      %12 = vector.load %arg9[%c0_10, %c0_11] : memref<16x128xf32, #tpu.memory_space<vmem>>, vector<16x128xf32>
      %c0_12 = arith.constant 0 : index
      %c0_13 = arith.constant 0 : index
      %13 = vector.load %arg4[%c0_12, %c0_13] : memref<1x128xf32, #tpu.memory_space<vmem>>, vector<1x128xf32>
      %14 = vector.broadcast %13 : vector<1x128xf32> to vector<16x128xf32>
      %15 = arith.addf %12, %14 : vector<16x128xf32>
      %c0_14 = arith.constant 0 : index
      %c0_15 = arith.constant 0 : index
      %16 = vector.load %arg5[%c0_14, %c0_15] : memref<16x128xf32, #tpu.memory_space<vmem>>, vector<16x128xf32>
      %17 = arith.addf %15, %16 : vector<16x128xf32>
      %cst_16 = arith.constant dense<0.000000e+00> : vector<16xf32>
      %18 = vector.multi_reduction <add>, %17, %cst_16 [1] : vector<16x128xf32> to vector<16xf32>
      %19 = vector.shape_cast %18 : vector<16xf32> to vector<16x1xf32>
      %cst_17 = arith.constant 7.812500e-03 : f32
      %20 = vector.broadcast %cst_17 : f32 to vector<16x1xf32>
      %21 = arith.mulf %19, %20 : vector<16x1xf32>
      %22 = vector.broadcast %21 : vector<16x1xf32> to vector<16x128xf32>
      %23 = arith.subf %17, %22 : vector<16x128xf32>
      %24 = arith.mulf %23, %23 : vector<16x128xf32>
      %cst_18 = arith.constant dense<0.000000e+00> : vector<16xf32>
      %25 = vector.multi_reduction <add>, %24, %cst_18 [1] : vector<16x128xf32> to vector<16xf32>
      %26 = vector.shape_cast %25 : vector<16xf32> to vector<16x1xf32>
      %cst_19 = arith.constant 7.812500e-03 : f32
      %27 = vector.broadcast %cst_19 : f32 to vector<16x1xf32>
      %28 = arith.mulf %26, %27 : vector<16x1xf32>
      %cst_20 = arith.constant 9.99999996E-13 : f32
      %29 = vector.broadcast %cst_20 : f32 to vector<16x1xf32>
      %30 = arith.addf %28, %29 : vector<16x1xf32>
      %31 = math.rsqrt %30 : vector<16x1xf32>
      %32 = vector.broadcast %31 : vector<16x1xf32> to vector<16x128xf32>
      %33 = arith.mulf %23, %32 : vector<16x128xf32>
      %c0_21 = arith.constant 0 : index
      %c0_22 = arith.constant 0 : index
      %34 = vector.load %arg6[%c0_21, %c0_22] : memref<1x128xf32, #tpu.memory_space<vmem>>, vector<1x128xf32>
      %35 = vector.broadcast %34 : vector<1x128xf32> to vector<16x128xf32>
      %36 = arith.mulf %33, %35 : vector<16x128xf32>
      %c0_23 = arith.constant 0 : index
      %c0_24 = arith.constant 0 : index
      %37 = vector.load %arg7[%c0_23, %c0_24] : memref<1x128xf32, #tpu.memory_space<vmem>>, vector<1x128xf32>
      %38 = vector.broadcast %37 : vector<1x128xf32> to vector<16x128xf32>
      %39 = arith.addf %36, %38 : vector<16x128xf32>
      %c0_25 = arith.constant 0 : index
      %c0_26 = arith.constant 0 : index
      %40 = vector.load %arg8[%c0_25, %c0_26] : memref<16x128xf32, #tpu.memory_space<vmem>>, vector<16x128xf32>
      tpu.vector_store %arg8[%c0_25, %c0_26], %39 {strides = array<i32>} : memref<16x128xf32, #tpu.memory_space<vmem>>, vector<16x128xf32>,
    } else {
    }
    return
  }
  func.func @transform_0(%arg0: i32, %arg1: i32) -> (i32, i32) {
    %c0_i32 = arith.constant 0 : i32
    return %arg0, %arg1 : i32, i32
  }
  func.func @transform_1(%arg0: i32, %arg1: i32) -> (i32, i32) {
    %c0_i32 = arith.constant 0 : i32
    %c0_i32_0 = arith.constant 0 : i32
    return %arg1, %c0_i32 : i32, i32
  }
  func.func @transform_2(%arg0: i32, %arg1: i32) -> (i32, i32) {
    %c0_i32 = arith.constant 0 : i32
    %c0_i32_0 = arith.constant 0 : i32
    %c0_i32_1 = arith.constant 0 : i32
    return %c0_i32, %c0_i32_0 : i32, i32
  }
  func.func @transform_3(%arg0: i32, %arg1: i32) -> (i32, i32) {
    %c0_i32 = arith.constant 0 : i32
    %c0_i32_0 = arith.constant 0 : i32
    return %arg0, %c0_i32 : i32, i32
  }
  func.func @transform_4(%arg0: i32, %arg1: i32) -> (i32, i32) {
    %c0_i32 = arith.constant 0 : i32
    %c0_i32_0 = arith.constant 0 : i32
    %c0_i32_1 = arith.constant 0 : i32
    return %c0_i32, %c0_i32_0 : i32, i32
  }
  func.func @transform_5(%arg0: i32, %arg1: i32) -> (i32, i32) {
    %c0_i32 = arith.constant 0 : i32
    %c0_i32_0 = arith.constant 0 : i32
    %c0_i32_1 = arith.constant 0 : i32
    return %c0_i32, %c0_i32_0 : i32, i32
  }
  func.func @transform_6(%arg0: i32, %arg1: i32) -> (i32, i32) {
    %c0_i32 = arith.constant 0 : i32
    %c0_i32_0 = arith.constant 0 : i32
    return %arg0, %c0_i32 : i32, i32
  }
}

module attributes {stable_mosaic.version = 11 : i64} {
  func.func @_output_kernel(%arg0: i32, %arg1: i32, %arg2: memref<16x256xf32, #tpu.memory_space<vmem>>, %arg3: memref<256x128xf32, #tpu.memory_space<vmem>>, %arg4: memref<1x128xf32, #tpu.memory_space<vmem>>, %arg5: memref<16x128xf32, #tpu.memory_space<vmem>>, %arg6: memref<1x128xf32, #tpu.memory_space<vmem>>, %arg7: memref<1x128xf32, #tpu.memory_space<vmem>>, %arg8: memref<16x128xf32, #tpu.memory_space<vmem>>, %arg9: memref<16x128xf32, #tpu.memory_space<vmem>>) attributes {dimension_semantics = [#tpu.dimension_semantics<parallel>, #tpu.dimension_semantics<arbitrary>], iteration_bounds = array<i64: 2, 1>, scalar_prefetch = 0 : i64, scratch_operands = 1 : i64, tpu.core_type = #tpu.core_type<tc>, window_params = [{transform_indices = @transform_0, window_bounds = array<i64: 16, 256>}, {transform_indices = @transform_1, window_bounds = array<i64: 256, 128>}, {pipeline_mode = #tpu.pipeline_mode<synchronous>, transform_indices = @transform_2, window_bounds = array<i64: 1, 128>}, {transform_indices = @transform_3, window_bounds = array<i64: 16, 128>}, {pipeline_mode = #tpu.pipeline_mode<synchronous>, transform_indices = @transform_4, window_bounds = array<i64: 1, 128>}, {pipeline_mode = #tpu.pipeline_mode<synchronous>, transform_indices = @transform_5, window_bounds = array<i64: 1, 128>}, {transform_indices = @transform_6, window_bounds = array<i64: 16, 128>}]} {
    %c0_i32 = arith.constant 0 : i32
    %0 = arith.cmpi eq, %arg1, %c0_i32 : i32
    %1 = arith.extui %0 : i1 to i32
    %c0_i32_0 = arith.constant 0 : i32
    %2 = arith.cmpi ne, %1, %c0_i32_0 : i32
    scf.if %2 {
      %cst_10 = arith.constant 0.000000e+00 : f32
      %12 = vector.broadcast %cst_10 : f32 to vector<16x128xf32>
      %c0_11 = arith.constant 0 : index
      %c0_12 = arith.constant 0 : index
      %13 = vector.load %arg9[%c0_11, %c0_12] : memref<16x128xf32, #tpu.memory_space<vmem>>, vector<16x128xf32>
      tpu.vector_store %arg9[%c0_11, %c0_12], %12 {strides = array<i32>} : memref<16x128xf32, #tpu.memory_space<vmem>>, vector<16x128xf32>,
    } else {
    }
    %c0 = arith.constant 0 : index
    %c0_1 = arith.constant 0 : index
    %3 = vector.load %arg9[%c0, %c0_1] : memref<16x128xf32, #tpu.memory_space<vmem>>, vector<16x128xf32>
    %c0_2 = arith.constant 0 : index
    %c0_3 = arith.constant 0 : index
    %4 = vector.load %arg2[%c0_2, %c0_3] : memref<16x256xf32, #tpu.memory_space<vmem>>, vector<16x256xf32>
    %c0_4 = arith.constant 0 : index
    %c0_5 = arith.constant 0 : index
    %5 = vector.load %arg3[%c0_4, %c0_5] : memref<256x128xf32, #tpu.memory_space<vmem>>, vector<256x128xf32>
    %cst = arith.constant dense<0.000000e+00> : vector<16x128xf32>
    %6 = tpu.matmul %4, %5, %cst {dimension_numbers = #tpu.dot_dimension_numbers<[1], [0], [0], [1], [0, 0, 1, 1], [], []>} : vector<16x256xf32>, vector<256x128xf32>, vector<16x128xf32> -> vector<16x128xf32>
    %7 = arith.addf %3, %6 : vector<16x128xf32>
    %c0_6 = arith.constant 0 : index
    %c0_7 = arith.constant 0 : index
    %8 = vector.load %arg9[%c0_6, %c0_7] : memref<16x128xf32, #tpu.memory_space<vmem>>, vector<16x128xf32>
    tpu.vector_store %arg9[%c0_6, %c0_7], %7 {strides = array<i32>} : memref<16x128xf32, #tpu.memory_space<vmem>>, vector<16x128xf32>,
    %c0_i32_8 = arith.constant 0 : i32
    %9 = arith.cmpi eq, %arg1, %c0_i32_8 : i32
    %10 = arith.extui %9 : i1 to i32
    %c0_i32_9 = arith.constant 0 : i32
    %11 = arith.cmpi ne, %10, %c0_i32_9 : i32
    scf.if %11 {
      %c0_10 = arith.constant 0 : index
      %c0_11 = arith.constant 0 : index
      %12 = vector.load %arg9[%c0_10, %c0_11] : memref<16x128xf32, #tpu.memory_space<vmem>>, vector<16x128xf32>
      %c0_12 = arith.constant 0 : index
      %c0_13 = arith.constant 0 : index
      %13 = vector.load %arg4[%c0_12, %c0_13] : memref<1x128xf32, #tpu.memory_space<vmem>>, vector<1x128xf32>
      %14 = vector.broadcast %13 : vector<1x128xf32> to vector<16x128xf32>
      %15 = arith.addf %12, %14 : vector<16x128xf32>
      %c0_14 = arith.constant 0 : index
      %c0_15 = arith.constant 0 : index
      %16 = vector.load %arg5[%c0_14, %c0_15] : memref<16x128xf32, #tpu.memory_space<vmem>>, vector<16x128xf32>
      %17 = arith.addf %15, %16 : vector<16x128xf32>
      %cst_16 = arith.constant dense<0.000000e+00> : vector<16xf32>
      %18 = vector.multi_reduction <add>, %17, %cst_16 [1] : vector<16x128xf32> to vector<16xf32>
      %19 = vector.shape_cast %18 : vector<16xf32> to vector<16x1xf32>
      %cst_17 = arith.constant 7.812500e-03 : f32
      %20 = vector.broadcast %cst_17 : f32 to vector<16x1xf32>
      %21 = arith.mulf %19, %20 : vector<16x1xf32>
      %22 = vector.broadcast %21 : vector<16x1xf32> to vector<16x128xf32>
      %23 = arith.subf %17, %22 : vector<16x128xf32>
      %24 = arith.mulf %23, %23 : vector<16x128xf32>
      %cst_18 = arith.constant dense<0.000000e+00> : vector<16xf32>
      %25 = vector.multi_reduction <add>, %24, %cst_18 [1] : vector<16x128xf32> to vector<16xf32>
      %26 = vector.shape_cast %25 : vector<16xf32> to vector<16x1xf32>
      %cst_19 = arith.constant 7.812500e-03 : f32
      %27 = vector.broadcast %cst_19 : f32 to vector<16x1xf32>
      %28 = arith.mulf %26, %27 : vector<16x1xf32>
      %cst_20 = arith.constant 9.99999996E-13 : f32
      %29 = vector.broadcast %cst_20 : f32 to vector<16x1xf32>
      %30 = arith.addf %28, %29 : vector<16x1xf32>
      %31 = math.rsqrt %30 : vector<16x1xf32>
      %32 = vector.broadcast %31 : vector<16x1xf32> to vector<16x128xf32>
      %33 = arith.mulf %23, %32 : vector<16x128xf32>
      %c0_21 = arith.constant 0 : index
      %c0_22 = arith.constant 0 : index
      %34 = vector.load %arg6[%c0_21, %c0_22] : memref<1x128xf32, #tpu.memory_space<vmem>>, vector<1x128xf32>
      %35 = vector.broadcast %34 : vector<1x128xf32> to vector<16x128xf32>
      %36 = arith.mulf %33, %35 : vector<16x128xf32>
      %c0_23 = arith.constant 0 : index
      %c0_24 = arith.constant 0 : index
      %37 = vector.load %arg7[%c0_23, %c0_24] : memref<1x128xf32, #tpu.memory_space<vmem>>, vector<1x128xf32>
      %38 = vector.broadcast %37 : vector<1x128xf32> to vector<16x128xf32>
      %39 = arith.addf %36, %38 : vector<16x128xf32>
      %c0_25 = arith.constant 0 : index
      %c0_26 = arith.constant 0 : index
      %40 = vector.load %arg8[%c0_25, %c0_26] : memref<16x128xf32, #tpu.memory_space<vmem>>, vector<16x128xf32>
      tpu.vector_store %arg8[%c0_25, %c0_26], %39 {strides = array<i32>} : memref<16x128xf32, #tpu.memory_space<vmem>>, vector<16x128xf32>,
    } else {
    }
    return
  }
  func.func @transform_0(%arg0: i32, %arg1: i32) -> (i32, i32) {
    %c0_i32 = arith.constant 0 : i32
    return %arg0, %arg1 : i32, i32
  }
  func.func @transform_1(%arg0: i32, %arg1: i32) -> (i32, i32) {
    %c0_i32 = arith.constant 0 : i32
    %c0_i32_0 = arith.constant 0 : i32
    return %arg1, %c0_i32 : i32, i32
  }
  func.func @transform_2(%arg0: i32, %arg1: i32) -> (i32, i32) {
    %c0_i32 = arith.constant 0 : i32
    %c0_i32_0 = arith.constant 0 : i32
    %c0_i32_1 = arith.constant 0 : i32
    return %c0_i32, %c0_i32_0 : i32, i32
  }
  func.func @transform_3(%arg0: i32, %arg1: i32) -> (i32, i32) {
    %c0_i32 = arith.constant 0 : i32
    %c0_i32_0 = arith.constant 0 : i32
    return %arg0, %c0_i32 : i32, i32
  }
  func.func @transform_4(%arg0: i32, %arg1: i32) -> (i32, i32) {
    %c0_i32 = arith.constant 0 : i32
    %c0_i32_0 = arith.constant 0 : i32
    %c0_i32_1 = arith.constant 0 : i32
    return %c0_i32, %c0_i32_0 : i32, i32
  }
  func.func @transform_5(%arg0: i32, %arg1: i32) -> (i32, i32) {
    %c0_i32 = arith.constant 0 : i32
    %c0_i32_0 = arith.constant 0 : i32
    %c0_i32_1 = arith.constant 0 : i32
    return %c0_i32, %c0_i32_0 : i32, i32
  }
  func.func @transform_6(%arg0: i32, %arg1: i32) -> (i32, i32) {
    %c0_i32 = arith.constant 0 : i32
    %c0_i32_0 = arith.constant 0 : i32
    return %arg0, %c0_i32 : i32, i32
  }
}

</mosaic_0001>

<llo_original>
// kernel: tpu_custom_call.1
$region0: #{tpu_custom_call.1}
  #allocation0 [shape = 'u32[]', space=smem, size = 0x4, offset = 0x4, fixed_abs, tag = 'smem constant byte address 0x4 - core index']
  #allocation1 [shape = 'u32[144,128]{1,0:T(1,128)}', space=vmem, size = 0x12000, scoped, tag = 'internal scratch']
  #allocation2 [shape = 'f32[16,128]{1,0:T(8,128)}', space=vmem, size = 0x2000, scoped, tag = 'scratch operand']
  %s0 = inlined_call_operand.hbm [shape: f32[32,256], index: 0, kind: input, shape index: {}]
  %s1 = inlined_call_operand.hbm [shape: f32[256,128], index: 1, kind: input, shape index: {}]
  %s2 = inlined_call_operand.vmem [shape: f32[1,128], index: 2, kind: input, shape index: {}]
  %s3 = inlined_call_operand.hbm [shape: f32[32,128], index: 3, kind: input, shape index: {}]
  %s4 = inlined_call_operand.vmem [shape: f32[1,128], index: 4, kind: input, shape index: {}]
  %s5 = inlined_call_operand.vmem [shape: f32[1,128], index: 5, kind: input, shape index: {}]
  %s6 = inlined_call_operand.hbm [shape: f32[32,128], index: 6, kind: output, shape index: {}]
  %s7 = sld [smem:[#allocation0]]
  $region77: #{tpu_custom_call.1} parent=0
    _
  %s9 = ssub.s32 1, %s7
  %s10 = scalar_select 0, %s9, %s7
  $region1: #{tpu_custom_call.1} parent=0
    #allocation3 [shape = 'u8[32768]{0}', space=vmem, size = 0x8000, scoped, tag = 'input window, operand 0']
    #allocation4 [shape = 's32[2]{0}', space=sflag, size = 0x8, scoped, tag = 'scoped memory for tpu_custom_call.1']
    #allocation5 [shape = 's32[2]{0}', space=sflag, size = 0x8, scoped, tag = 'scoped memory for tpu_custom_call.1']
    #allocation6 [shape = 'u8[131072]{0}', space=vmem, size = 0x20000, scoped, tag = 'input window, operand 1, single buffered']
    #allocation7 [shape = 's32[1]{0}', space=sflag, size = 0x4, scoped, tag = 'scoped memory for tpu_custom_call.1']
    #allocation8 [shape = 'u8[16384]{0}', space=vmem, size = 0x4000, scoped, tag = 'input window, operand 3']
    #allocation9 [shape = 'u8[16384]{0}', space=vmem, size = 0x4000, scoped, tag = 'output window, operand 0']
    %11 = vsyncpa [#allocation4], 0
    %s12 = scalar_lea.sflag [#allocation4], 1
    %13 = vsyncpa %s12, 0
    %14 = vsyncpa [#allocation7], 0
    %15 = vsyncpa [#allocation5], 0
    %s16 = scalar_lea.sflag [#allocation5], 1
    %17 = vsyncpa %s16, 0
    loop: start=0, step=1, limit=4
    $region2: #{tpu_custom_call.1} parent=1 // loop_pre_header
      _
    $region3: #{tpu_custom_call.1} parent=1 // loop_header
      %s19 = sphi 0, %s23
      %p20 = scmp.ge.s32.totalorder %s19, 4
      %s26 = sphi 0, %s38
      %s27 = sphi 0, %s34
      %s28 = sphi 0, %s26
      %s29 = sphi 0, %s27
      %s30 = sphi 0, %s28
      %s31 = sphi 0, %s29
      %s43 = sphi 0, %s45
      %s46 = sphi 0, %s43
      %s47 = sphi 0, %s46
      %s63 = sphi 0, %s47
      %s69 = sphi 0, %s71
      %s72 = sphi 0, %s69
      %s73 = sphi 0, %s72
      %s89 = sphi 0, %s73
      %s93 = sphi 0, %s93
      %s95 = sphi 0, %s93
      %s96 = sphi 0, %s95
      %s110 = sphi 0, %s96
      %s116 = sphi 0, %s118
      %s119 = sphi 0, %s116
      %s120 = sphi 0, %s119
      %s136 = sphi 0, %s120
      %s140 = sphi 0, %s140
      %s142 = sphi 0, %s140
      %s143 = sphi 0, %s142
      %s157 = sphi 0, %s143
      %s161 = sphi 0, %s161
      %s163 = sphi 0, %s161
      %s164 = sphi 0, %s163
      %s178 = sphi 0, %s164
      %s184 = sphi 0, %s186
      %s187 = sphi 0, %s184
      %s188 = sphi 0, %s187
      %s204 = sphi 0, %s188
    $region4: #{tpu_custom_call.1} parent=1 // loop_header_branch
      %22 = sbr.rel (%p20) target = $region8
    $region5: #{tpu_custom_call.1} parent=1 // loop_body
      %s24 = ssub.s32 %s19, 1
      %s25 = ssub.s32 %s19, 2
      %s32 = sadd.s32 1, %s27
      %p33 = scmp.ge.s32.totalorder %s32, 1
      %s34 = scalar_select %p33, 0, %s32
      %s35 = sadd.s32 1, %s26
      %s36 = scalar_select %p33, %s35, %s26
      %p37 = scmp.ge.s32.totalorder %s36, 2
      %s38 = scalar_select %p37, 0, %s36
      %s39 = ssub.s32 %s26, %s38
      %s40 = ssub.s32 %s27, %s34
      %s41 = sor.u32 %s39, %s40
      %p42 = scmp.eq.s32.totalorder %s41, 0
      %s44 = sadd.s32 %s43, 1
      %s45 = scalar_select %p42, %s43, %s44
      %p48 = pneg %p42
      %p49 = scmp.eq.s32.totalorder %s19, 1
      %p50 = por %p48, %p49
      %p51 = scmp.ne.s32.totalorder %s43, %s46
      %p52 = scmp.eq.s32.totalorder %s19, 0
      %p53 = por %p51, %p52
      %p54 = scmp.ne.s32.totalorder %s43, %s46
      %p55 = scmp.eq.s32.totalorder %s24, 1
      %p56 = por %p54, %p55
      %p57 = scmp.ne.s32.totalorder %s46, %s47
      %p58 = scmp.eq.s32.totalorder %s24, 0
      %p59 = por %p57, %p58
      %p60 = scmp.ne.s32.totalorder %s46, %s47
      %p61 = scmp.eq.s32.totalorder %s25, 1
      %p62 = por %p60, %p61
      %p64 = scmp.ne.s32.totalorder %s47, %s63
      %p65 = scmp.eq.s32.totalorder %s25, 0
      %p66 = por %p64, %p65
      %s67 = ssub.s32 %s27, %s34
      %p68 = scmp.eq.s32.totalorder %s67, 0
      %s70 = sadd.s32 %s69, 1
      %s71 = scalar_select %p68, %s69, %s70
      %p74 = pneg %p68
      %p75 = scmp.eq.s32.totalorder %s19, 1
      %p76 = por %p74, %p75
      %p77 = scmp.ne.s32.totalorder %s69, %s72
      %p78 = scmp.eq.s32.totalorder %s19, 0
      %p79 = por %p77, %p78
      %p80 = scmp.ne.s32.totalorder %s69, %s72
      %p81 = scmp.eq.s32.totalorder %s24, 1
      %p82 = por %p80, %p81
      %p83 = scmp.ne.s32.totalorder %s72, %s73
      %p84 = scmp.eq.s32.totalorder %s24, 0
      %p85 = por %p83, %p84
      %p86 = scmp.ne.s32.totalorder %s72, %s73
      %p87 = scmp.eq.s32.totalorder %s25, 1
      %p88 = por %p86, %p87
      %p90 = scmp.ne.s32.totalorder %s73, %s89
      %p91 = scmp.eq.s32.totalorder %s25, 0
      %p92 = por %p90, %p91
      %s94 = sadd.s32 %s93, 1
      %p97 = scmp.eq.s32.totalorder %s19, 1
      %p98 = scmp.ne.s32.totalorder %s93, %s95
      %p99 = scmp.eq.s32.totalorder %s19, 0
      %p100 = por %p98, %p99
      %p101 = scmp.ne.s32.totalorder %s93, %s95
      %p102 = scmp.eq.s32.totalorder %s24, 1
      %p103 = por %p101, %p102
      %p104 = scmp.ne.s32.totalorder %s95, %s96
      %p105 = scmp.eq.s32.totalorder %s24, 0
      %p106 = por %p104, %p105
      %p107 = scmp.ne.s32.totalorder %s95, %s96
      %p108 = scmp.eq.s32.totalorder %s25, 1
      %p109 = por %p107, %p108
      %p111 = scmp.ne.s32.totalorder %s96, %s110
      %p112 = scmp.eq.s32.totalorder %s25, 0
      %p113 = por %p111, %p112
      %s114 = ssub.s32 %s26, %s38
      %p115 = scmp.eq.s32.totalorder %s114, 0
      %s117 = sadd.s32 %s116, 1
      %s118 = scalar_select %p115, %s116, %s117
      %p121 = pneg %p115
      %p122 = scmp.eq.s32.totalorder %s19, 1
      %p123 = por %p121, %p122
      %p124 = scmp.ne.s32.totalorder %s116, %s119
      %p125 = scmp.eq.s32.totalorder %s19, 0
      %p126 = por %p124, %p125
      %p127 = scmp.ne.s32.totalorder %s116, %s119
      %p128 = scmp.eq.s32.totalorder %s24, 1
      %p129 = por %p127, %p128
      %p130 = scmp.ne.s32.totalorder %s119, %s120
      %p131 = scmp.eq.s32.totalorder %s24, 0
      %p132 = por %p130, %p131
      %p133 = scmp.ne.s32.totalorder %s119, %s120
      %p134 = scmp.eq.s32.totalorder %s25, 1
      %p135 = por %p133, %p134
      %p137 = scmp.ne.s32.totalorder %s120, %s136
      %p138 = scmp.eq.s32.totalorder %s25, 0
      %p139 = por %p137, %p138
      %s141 = sadd.s32 %s140, 1
      %p144 = scmp.eq.s32.totalorder %s19, 1
      %p145 = scmp.ne.s32.totalorder %s140, %s142
      %p146 = scmp.eq.s32.totalorder %s19, 0
      %p147 = por %p145, %p146
      %p148 = scmp.ne.s32.totalorder %s140, %s142
      %p149 = scmp.eq.s32.totalorder %s24, 1
      %p150 = por %p148, %p149
      %p151 = scmp.ne.s32.totalorder %s142, %s143
      %p152 = scmp.eq.s32.totalorder %s24, 0
      %p153 = por %p151, %p152
      %p154 = scmp.ne.s32.totalorder %s142, %s143
      %p155 = scmp.eq.s32.totalorder %s25, 1
      %p156 = por %p154, %p155
      %p158 = scmp.ne.s32.totalorder %s143, %s157
      %p159 = scmp.eq.s32.totalorder %s25, 0
      %p160 = por %p158, %p159
      %s162 = sadd.s32 %s161, 1
      %p165 = scmp.eq.s32.totalorder %s19, 1
      %p166 = scmp.ne.s32.totalorder %s161, %s163
      %p167 = scmp.eq.s32.totalorder %s19, 0
      %p168 = por %p166, %p167
      %p169 = scmp.ne.s32.totalorder %s161, %s163
      %p170 = scmp.eq.s32.totalorder %s24, 1
      %p171 = por %p169, %p170
      %p172 = scmp.ne.s32.totalorder %s163, %s164
      %p173 = scmp.eq.s32.totalorder %s24, 0
      %p174 = por %p172, %p173
      %p175 = scmp.ne.s32.totalorder %s163, %s164
      %p176 = scmp.eq.s32.totalorder %s25, 1
      %p177 = por %p175, %p176
      %p179 = scmp.ne.s32.totalorder %s164, %s178
      %p180 = scmp.eq.s32.totalorder %s25, 0
      %p181 = por %p179, %p180
      %s182 = ssub.s32 %s26, %s38
      %p183 = scmp.eq.s32.totalorder %s182, 0
      %s185 = sadd.s32 %s184, 1
      %s186 = scalar_select %p183, %s184, %s185
      %p189 = pneg %p183
      %p190 = scmp.eq.s32.totalorder %s19, 1
      %p191 = por %p189, %p190
      %p192 = scmp.ne.s32.totalorder %s184, %s187
      %p193 = scmp.eq.s32.totalorder %s19, 0
      %p194 = por %p192, %p193
      %p195 = scmp.ne.s32.totalorder %s184, %s187
      %p196 = scmp.eq.s32.totalorder %s24, 1
      %p197 = por %p195, %p196
      %p198 = scmp.ne.s32.totalorder %s187, %s188
      %p199 = scmp.eq.s32.totalorder %s24, 0
      %p200 = por %p198, %p199
      %p201 = scmp.ne.s32.totalorder %s187, %s188
      %p202 = scmp.eq.s32.totalorder %s25, 1
      %p203 = por %p201, %p202
      %p205 = scmp.ne.s32.totalorder %s188, %s204
      %p206 = scmp.eq.s32.totalorder %s25, 0
      %p207 = por %p205, %p206
      %p208 = scmp.le.s32.totalorder 1, %s19
      %p209 = scmp.lt.s32.totalorder %s19, 3
      %p210 = pnand %p208, %p209
      %p211 = pneg %p210
      // Predicated region
      $region9: #{tpu_custom_call.1} parent=5 // pred_check
        _
      $region10: #{tpu_custom_call.1} parent=5 // pred_check_branch
        %213 = sbr.rel (%p210) target = $region12
      $region11: #{tpu_custom_call.1} parent=5 // pred_region
        %s214 = ssub.s32 %s19, 1
        // Predicated region
        $region13: #{tpu_custom_call.1} parent=11 // pred_check
          %p215 = pneg %p85
        $region14: #{tpu_custom_call.1} parent=11 // pred_check_branch
          %217 = sbr.rel (%p215) target = $region16
        $region15: #{tpu_custom_call.1} parent=11 // pred_region
          %s218 = smul.u32 32, %s29
          %s220 = ssub.s32 4096, 4096
          %221 = vsyncadd [#allocation7], %s220
          %s222 = smul.addr %s218, 128
          %s223 = scalar_lea.hbm %s1, %s222
          %s224 = sshll.u32 [#allocation6], 4
          %s225 = int_to_ptr.vmem [resolvable:$true] %s224
          %230 = dma.hbm_to_vmem [thread:$0]  %s223, 4096, %s225, [#allocation7], 128, 128, 8
        $region16: #{tpu_custom_call.1} parent=11 // pred_fallthru
          _
        // Predicated region
        $region17: #{tpu_custom_call.1} parent=11 // pred_check
          %p231 = pneg %p106
        $region18: #{tpu_custom_call.1} parent=11 // pred_check_branch
          %233 = sbr.rel (%p231) target = $region20
        $region19: #{tpu_custom_call.1} parent=11 // pred_region
          _
        $region20: #{tpu_custom_call.1} parent=11 // pred_fallthru
          _
        // Predicated region
        $region21: #{tpu_custom_call.1} parent=11 // pred_check
          %p234 = pneg %p153
        $region22: #{tpu_custom_call.1} parent=11 // pred_check_branch
          %236 = sbr.rel (%p234) target = $region24
        $region23: #{tpu_custom_call.1} parent=11 // pred_region
          _
        $region24: #{tpu_custom_call.1} parent=11 // pred_fallthru
          _
        // Predicated region
        $region25: #{tpu_custom_call.1} parent=11 // pred_check
          %p237 = pneg %p174
        $region26: #{tpu_custom_call.1} parent=11 // pred_check_branch
          %239 = sbr.rel (%p237) target = $region28
        $region27: #{tpu_custom_call.1} parent=11 // pred_region
          _
        $region28: #{tpu_custom_call.1} parent=11 // pred_fallthru
          _
      $region12: #{tpu_custom_call.1} parent=5 // pred_fallthru
        _
      %p240 = scmp.lt.s32.totalorder %s19, 2
      // Predicated region
      $region29: #{tpu_custom_call.1} parent=5 // pred_check
        %p241 = pneg %p240
      $region30: #{tpu_custom_call.1} parent=5 // pred_check_branch
        %243 = sbr.rel (%p241) target = $region32
      $region31: #{tpu_custom_call.1} parent=5 // pred_region
        // Predicated region
        $region33: #{tpu_custom_call.1} parent=31 // pred_check
          %p244 = pneg %p53
        $region34: #{tpu_custom_call.1} parent=31 // pred_check_branch
          %246 = sbr.rel (%p244) target = $region36
        $region35: #{tpu_custom_call.1} parent=31 // pred_region
          %s247 = sand.u32 %s19, 1
          %s248 = scalar_lea.sflag [#allocation4], %s247
          %s249 = sand.u32 %s43, 1
          %s250 = smul.addr %s249, 32
          %s251 = scalar_lea.vmem [#allocation3], %s250
          %s252 = smul.u32 2, %s26
          %s253 = smul.u32 2, %s27
          %s255 = ssub.s32 512, 512
          %256 = vsyncadd %s248, %s255
          %s257 = smul.addr %s252, 2
          %s258 = sadd.s32 %s253, %s257
          %s259 = smul.addr %s258, 128
          %s260 = scalar_lea.hbm %s0, %s259
          %s261 = sshll.u32 %s251, 4
          %s262 = int_to_ptr.vmem [resolvable:$true] %s261
          %267 = dma.hbm_to_vmem [thread:$0]  %s260, 512, %s262, %s248, 256, 256, 16
        $region36: #{tpu_custom_call.1} parent=31 // pred_fallthru
          _
        // Predicated region
        $region37: #{tpu_custom_call.1} parent=31 // pred_check
          %p268 = pneg %p126
        $region38: #{tpu_custom_call.1} parent=31 // pred_check_branch
          %270 = sbr.rel (%p268) target = $region40
        $region39: #{tpu_custom_call.1} parent=31 // pred_region
          %s271 = sand.u32 %s19, 1
          %s272 = scalar_lea.sflag [#allocation4], %s271
          %s273 = sand.u32 %s116, 1
          %s274 = smul.addr %s273, 16
          %s275 = scalar_lea.vmem [#allocation8], %s274
          %s276 = smul.u32 2, %s26
          %s278 = ssub.s32 256, 256
          %279 = vsyncadd %s272, %s278
          %s280 = smul.addr %s276, 128
          %s281 = scalar_lea.hbm %s3, %s280
          %s282 = sshll.u32 %s275, 4
          %s283 = int_to_ptr.vmem [resolvable:$true] %s282
          %288 = dma.hbm_to_vmem [thread:$0]  %s281, 256, %s283, %s272, 128, 128, 8
        $region40: #{tpu_custom_call.1} parent=31 // pred_fallthru
          _
      $region32: #{tpu_custom_call.1} parent=5 // pred_fallthru
        _
      %p289 = scmp.le.s32.totalorder 1, %s19
      %p290 = scmp.lt.s32.totalorder %s19, 3
      %p291 = pnand %p289, %p290
      %p292 = pneg %p291
      // Predicated region
      $region41: #{tpu_custom_call.1} parent=5 // pred_check
        _
      $region42: #{tpu_custom_call.1} parent=5 // pred_check_branch
        %294 = sbr.rel (%p291) target = $region44
      $region43: #{tpu_custom_call.1} parent=5 // pred_region
        %s295 = ssub.s32 %s19, 1
        %s296 = sand.u32 %s24, 1
        %s297 = scalar_lea.sflag [#allocation4], %s296
        %s298 = sand.u32 %s46, 1
        %s299 = smul.addr %s298, 32
        %s300 = scalar_lea.vmem [#allocation3], %s299
        // Predicated region
        $region45: #{tpu_custom_call.1} parent=43 // pred_check
          %p301 = pneg %p59
        $region46: #{tpu_custom_call.1} parent=43 // pred_check_branch
          %303 = sbr.rel (%p301) target = $region48
        $region47: #{tpu_custom_call.1} parent=43 // pred_region
          %304 = dma.done %s297, 512
        $region48: #{tpu_custom_call.1} parent=43 // pred_fallthru
          _
        // Predicated region
        $region49: #{tpu_custom_call.1} parent=43 // pred_check
          %p305 = pneg %p85
        $region50: #{tpu_custom_call.1} parent=43 // pred_check_branch
          %307 = sbr.rel (%p305) target = $region52
        $region51: #{tpu_custom_call.1} parent=43 // pred_region
          %308 = dma.done [#allocation7], 4096
        $region52: #{tpu_custom_call.1} parent=43 // pred_fallthru
          _
        %s309 = sand.u32 %s24, 1
        %s310 = scalar_lea.sflag [#allocation4], %s309
        %s311 = sand.u32 %s119, 1
        %s312 = smul.addr %s311, 16
        %s313 = scalar_lea.vmem [#allocation8], %s312
        // Predicated region
        $region53: #{tpu_custom_call.1} parent=43 // pred_check
          %p314 = pneg %p132
        $region54: #{tpu_custom_call.1} parent=43 // pred_check_branch
          %316 = sbr.rel (%p314) target = $region56
        $region55: #{tpu_custom_call.1} parent=43 // pred_region
          %317 = dma.done %s310, 256
        $region56: #{tpu_custom_call.1} parent=43 // pred_fallthru
          _
        %s318 = sand.u32 %s24, 1
        %s319 = scalar_lea.sflag [#allocation4], %s318
        %s320 = sand.u32 %s46, 1
        %s321 = smul.addr %s320, 32
        %s322 = scalar_lea.vmem [#allocation3], %s321
        %p323 = pneg %p59
        %p324 = pneg %p56
        %p325 = pneg %p85
        %p326 = pneg %p82
        %p327 = pneg %p106
        %p328 = pneg %p103
        %s329 = sand.u32 %s24, 1
        %s330 = scalar_lea.sflag [#allocation4], %s329
        %s331 = sand.u32 %s119, 1
        %s332 = smul.addr %s331, 16
        %s333 = scalar_lea.vmem [#allocation8], %s332
        %p334 = pneg %p132
        %p335 = pneg %p129
        %p336 = pneg %p153
        %p337 = pneg %p150
        %p338 = pneg %p174
        %p339 = pneg %p171
        %p340 = pneg %p200
        %p341 = pneg %p197
        %s342 = sand.u32 %s187, 1
        %s343 = scalar_lea.sflag [#allocation5], %s342
        %s344 = sand.u32 %s187, 1
        %s345 = smul.addr %s344, 16
        %s346 = scalar_lea.vmem [#allocation9], %s345
        %s347 = smul.u32 2, %s28
        %s348 = smul.u32 2, %s29
        %s349 = smul.u32 32, %s29
        %s350 = smul.u32 2, %s28
        %s351 = smul.u32 2, %s28
        %p352 = scmp.eq.s32.totalorder %s29, 0
        // Predicated region
        $region57: #{tpu_custom_call.1} parent=43 // pred_check
          %p353 = pneg %p352
        $region58: #{tpu_custom_call.1} parent=43 // pred_check_branch
          %355 = sbr.rel (%p353) target = $region60
        $region59: #{tpu_custom_call.1} parent=43 // pred_region
          %356 = vst [vmem:[#allocation2] sm:$0xff] 0.0
          %357 = vst [vmem:[#allocation2 + $0x8] sm:$0xff] 0.0
        $region60: #{tpu_custom_call.1} parent=43 // pred_fallthru
          _
        %v358 = vld [vmem:[#allocation2] sm:$0xff]
        %v359 = vld [vmem:[#allocation2 + $0x8] sm:$0xff]
        %v360 = vld [vmem:[%s300] sm:$0xff]
        %v361 = vld [vmem:[%s300 + $0x8] sm:$0xff]
        %v362 = vld [vmem:[%s300 + $0x10] sm:$0xff]
        %v363 = vld [vmem:[%s300 + $0x18] sm:$0xff]
        %v364 = vld [vmem:[#allocation6] sm:$0xff]
        %v365 = vld [vmem:[#allocation6 + $0x8] sm:$0xff]
        %v366 = vld [vmem:[#allocation6 + $0x10] sm:$0xff]
        %v367 = vld [vmem:[#allocation6 + $0x18] sm:$0xff]
        %v368 = vld [vmem:[#allocation6 + $0x20] sm:$0xff]
        %v369 = vld [vmem:[#allocation6 + $0x28] sm:$0xff]
        %v370 = vld [vmem:[#allocation6 + $0x30] sm:$0xff]
        %v371 = vld [vmem:[#allocation6 + $0x38] sm:$0xff]
        %v372 = vld [vmem:[#allocation6 + $0x40] sm:$0xff]
        %v373 = vld [vmem:[#allocation6 + $0x48] sm:$0xff]
        %v374 = vld [vmem:[#allocation6 + $0x50] sm:$0xff]
        %v375 = vld [vmem:[#allocation6 + $0x58] sm:$0xff]
        %v376 = vld [vmem:[#allocation6 + $0x60] sm:$0xff]
        %v377 = vld [vmem:[#allocation6 + $0x68] sm:$0xff]
        %v378 = vld [vmem:[#allocation6 + $0x70] sm:$0xff]
        %v379 = vld [vmem:[#allocation6 + $0x78] sm:$0xff]
        %v380 = vld [vmem:[#allocation6 + $0x80] sm:$0xff]
        %v381 = vld [vmem:[#allocation6 + $0x88] sm:$0xff]
        %v382 = vld [vmem:[#allocation6 + $0x90] sm:$0xff]
        %v383 = vld [vmem:[#allocation6 + $0x98] sm:$0xff]
        %v384 = vld [vmem:[#allocation6 + $0xa0] sm:$0xff]
        %v385 = vld [vmem:[#allocation6 + $0xa8] sm:$0xff]
        %v386 = vld [vmem:[#allocation6 + $0xb0] sm:$0xff]
        %v387 = vld [vmem:[#allocation6 + $0xb8] sm:$0xff]
        %v388 = vld [vmem:[#allocation6 + $0xc0] sm:$0xff]
        %v389 = vld [vmem:[#allocation6 + $0xc8] sm:$0xff]
        %v390 = vld [vmem:[#allocation6 + $0xd0] sm:$0xff]
        %v391 = vld [vmem:[#allocation6 + $0xd8] sm:$0xff]
        %v392 = vld [vmem:[#allocation6 + $0xe0] sm:$0xff]
        %v393 = vld [vmem:[#allocation6 + $0xe8] sm:$0xff]
        %v394 = vld [vmem:[#allocation6 + $0xf0] sm:$0xff]
        %v395 = vld [vmem:[#allocation6 + $0xf8] sm:$0xff]
        %396 = vmatprep.subr.mxu0 0.0
        %397 = vmatpush1.msra.mxu0 %v364
        %398 = vmatprep.subr.mxu0 0.0
        %399 = vmatpush1.msra.mxu0 %v365
        %400 = vmatprep.subr.mxu0 0.0
        %401 = vmatpush1.msra.mxu0 %v366
        %402 = vmatprep.subr.mxu0 0.0
        %403 = vmatpush1.msra.mxu0 %v367
        %404 = vmatprep.subr.mxu0 0.0
        %405 = vmatpush1.msra.mxu0 %v368
        %406 = vmatprep.subr.mxu0 0.0
        %407 = vmatpush1.msra.mxu0 %v369
        %408 = vmatprep.subr.mxu0 0.0
        %409 = vmatpush1.msra.mxu0 %v370
        %410 = vmatprep.subr.mxu0 0.0
        %411 = vmatpush1.msra.mxu0 %v371
        %412 = vmatprep.subr.mxu0 0.0
        %413 = vmatpush1.msra.mxu0 %v372
        %414 = vmatprep.subr.mxu0 0.0
        %415 = vmatpush1.msra.mxu0 %v373
        %416 = vmatprep.subr.mxu0 0.0
        %417 = vmatpush1.msra.mxu0 %v374
        %418 = vmatprep.subr.mxu0 0.0
        %419 = vmatpush1.msra.mxu0 %v375
        %420 = vmatprep.subr.mxu0 0.0
        %421 = vmatpush1.msra.mxu0 %v376
        %422 = vmatprep.subr.mxu0 0.0
        %423 = vmatpush1.msra.mxu0 %v377
        %424 = vmatprep.subr.mxu0 0.0
        %425 = vmatpush1.msra.mxu0 %v378
        %426 = vmatprep.subr.mxu0 0.0
        %427 = vmatpush1.msra.mxu0 %v379
        %428 = vmatprep.subr.mxu0 0.0
        %429 = vmatpush1.msra.mxu0 %v380
        %430 = vmatprep.subr.mxu0 0.0
        %431 = vmatpush1.msra.mxu0 %v381
        %432 = vmatprep.subr.mxu0 0.0
        %433 = vmatpush1.msra.mxu0 %v382
        %434 = vmatprep.subr.mxu0 0.0
        %435 = vmatpush1.msra.mxu0 %v383
        %436 = vmatprep.subr.mxu0 0.0
        %437 = vmatpush1.msra.mxu0 %v384
        %438 = vmatprep.subr.mxu0 0.0
        %439 = vmatpush1.msra.mxu0 %v385
        %440 = vmatprep.subr.mxu0 0.0
        %441 = vmatpush1.msra.mxu0 %v386
        %442 = vmatprep.subr.mxu0 0.0
        %443 = vmatpush1.msra.mxu0 %v387
        %444 = vmatprep.subr.mxu0 0.0
        %445 = vmatpush1.msra.mxu0 %v388
        %446 = vmatprep.subr.mxu0 0.0
        %447 = vmatpush1.msra.mxu0 %v389
        %448 = vmatprep.subr.mxu0 0.0
        %449 = vmatpush1.msra.mxu0 %v390
        %450 = vmatprep.subr.mxu0 0.0
        %451 = vmatpush1.msra.mxu0 %v391
        %452 = vmatprep.subr.mxu0 0.0
        %453 = vmatpush1.msra.mxu0 %v392
        %454 = vmatprep.subr.mxu0 0.0
        %455 = vmatpush1.msra.mxu0 %v393
        %456 = vmatprep.subr.mxu0 0.0
        %457 = vmatpush1.msra.mxu0 %v394
        %458 = vmatprep.subr.mxu0 0.0
        %459 = vmatpush1.msra.mxu0 %v395
        %460 = vmatprep.mubr.f32.mxu0 %v361
        %461 = vmatmul.mubr.f32.gmra.mrb[0].mxu0 %v360
        %v462 = vpop.f32.mrb[0].mxu0
        %v463 = vadd.f32 0.0, %v462
        %v464 = vpop.f32.mrb[0].mxu0
        %465 = vmatprep.mubr.f32.mxu0 %v363
        %466 = vmatmul.mubr.f32.gmra.mrb[0].mxu0 %v362
        %v467 = vpop.f32.mrb[0].mxu0
        %v468 = vadd.f32 0.0, %v467
        %v469 = vpop.f32.mrb[0].mxu0
        %470 = vdwg.mxu0
        %v471 = vadd.f32 %v358, %v463
        %v472 = vadd.f32 %v359, %v468
        %473 = vst [vmem:[#allocation2] sm:$0xff] %v471
        %474 = vst [vmem:[#allocation2 + $0x8] sm:$0xff] %v472
        // Predicated region
        $region61: #{tpu_custom_call.1} parent=43 // pred_check
          %p475 = pneg %p352
        $region62: #{tpu_custom_call.1} parent=43 // pred_check_branch
          %477 = sbr.rel (%p475) target = $region64
        $region63: #{tpu_custom_call.1} parent=43 // pred_region
          %v478 = vld [vmem:[#allocation2] sm:$0xff]
          %v479 = vld [vmem:[#allocation2 + $0x8] sm:$0xff]
          %v480 = vld [vmem:[%s2] sm:$0x1]
          %v482 = vlaneseq
          %v483 = vshrl.u32 %v482, 7
          %v484 = vsub.s32 0, %v483
          %v485 = vrot.slane %v480, %v484
          %v487 = vadd.f32 %v478, %v485
          %v488 = vadd.f32 %v479, %v485
          %v489 = vld [vmem:[%s313] sm:$0xff]
          %v490 = vld [vmem:[%s313 + $0x8] sm:$0xff]
          %v491 = vadd.f32 %v487, %v489
          %v492 = vadd.f32 %v488, %v490
          %493 = vadd.xlane.f32.xlu0 %v491
          %v494 = vpop.xlane.xlu0 %493
          %495 = vadd.xlane.f32.xlu0 %v492
          %v496 = vpop.xlane.xlu0 %495
          %v497 = vmul.f32 %v494, 0.0078125
          %v498 = vmul.f32 %v496, 0.0078125
          %v499 = vsub.f32 %v491, %v497
          %v500 = vsub.f32 %v492, %v498
          %v501 = vmul.f32 %v499, %v499
          %v502 = vmul.f32 %v500, %v500
          %503 = vadd.xlane.f32.xlu0 %v501
          %v504 = vpop.xlane.xlu0 %503
          %505 = vadd.xlane.f32.xlu0 %v502
          %v506 = vpop.xlane.xlu0 %505
          %v507 = vmul.f32 %v504, 0.0078125
          %v508 = vmul.f32 %v506, 0.0078125
          %v509 = vadd.f32 %v507, 1e-12
          %v510 = vadd.f32 %v508, 1e-12
          %v511 = vrsqrt.pop %v509
          %v512 = vrsqrt.pop %v510
          %v513 = vmul.f32 %v499, %v511
          %v514 = vmul.f32 %v500, %v512
          %v515 = vld [vmem:[%s4] sm:$0x1]
          %v517 = vlaneseq
          %v518 = vshrl.u32 %v517, 7
          %v519 = vsub.s32 0, %v518
          %v520 = vrot.slane %v515, %v519
          %v522 = vmul.f32 %v513, %v520
          %v523 = vmul.f32 %v514, %v520
          %v524 = vld [vmem:[%s5] sm:$0x1]
          %v526 = vlaneseq
          %v527 = vshrl.u32 %v526, 7
          %v528 = vsub.s32 0, %v527
          %v529 = vrot.slane %v524, %v528
          %v531 = vadd.f32 %v522, %v529
          %v532 = vadd.f32 %v523, %v529
          %533 = vst [vmem:[%s346] sm:$0xff] %v531
          %534 = vst [vmem:[%s346 + $0x8] sm:$0xff] %v532
        $region64: #{tpu_custom_call.1} parent=43 // pred_fallthru
          _
        %s535 = sand.u32 %s187, 1
        %s536 = scalar_lea.sflag [#allocation5], %s535
        %s537 = sand.u32 %s187, 1
        %s538 = smul.addr %s537, 16
        %s539 = scalar_lea.vmem [#allocation9], %s538
        // Predicated region
        $region65: #{tpu_custom_call.1} parent=43 // pred_check
          %p540 = pneg %p197
        $region66: #{tpu_custom_call.1} parent=43 // pred_check_branch
          %542 = sbr.rel (%p540) target = $region68
        $region67: #{tpu_custom_call.1} parent=43 // pred_region
          %s543 = smul.u32 2, %s28
          %s545 = ssub.s32 256, 256
          %546 = vsyncadd %s536, %s545
          %s547 = smul.addr %s543, 128
          %s548 = scalar_lea.hbm %s6, %s547
          %s549 = sshll.u32 %s539, 4
          %s550 = int_to_ptr.vmem [resolvable:$true] %s549
          %555 = dma.vmem_to_hbm [thread:$0]  %s550, 256, %s548, %s536, 128, 128, 8
        $region68: #{tpu_custom_call.1} parent=43 // pred_fallthru
          _
      $region44: #{tpu_custom_call.1} parent=5 // pred_fallthru
        _
      %p556 = scmp.le.s32.totalorder 2, %s19
      // Predicated region
      $region69: #{tpu_custom_call.1} parent=5 // pred_check
        %p557 = pneg %p556
      $region70: #{tpu_custom_call.1} parent=5 // pred_check_branch
        %559 = sbr.rel (%p557) target = $region72
      $region71: #{tpu_custom_call.1} parent=5 // pred_region
        %s560 = ssub.s32 %s19, 2
        // Predicated region
        $region73: #{tpu_custom_call.1} parent=71 // pred_check
          %p561 = pneg %p203
        $region74: #{tpu_custom_call.1} parent=71 // pred_check_branch
          %563 = sbr.rel (%p561) target = $region76
        $region75: #{tpu_custom_call.1} parent=71 // pred_region
          %s564 = sand.u32 %s188, 1
          %s565 = scalar_lea.sflag [#allocation5], %s564
          %s566 = sand.u32 %s188, 1
          %s567 = smul.addr %s566, 16
          %s568 = scalar_lea.vmem [#allocation9], %s567
          %569 = dma.done %s565, 256
        $region76: #{tpu_custom_call.1} parent=71 // pred_fallthru
          _
      $region72: #{tpu_custom_call.1} parent=5 // pred_fallthru
        _
    $region6: #{tpu_custom_call.1} parent=1 // loop_footer
      %s23 = sadd.s32 1, %s19
    $region7: #{tpu_custom_call.1} parent=1 // loop_footer_branch
      %18 = sbr.rel target = $region3
    $region8: #{tpu_custom_call.1} parent=1 // loop_exit
      _
    %570 = vsyncpa [#allocation4], 1
    %s571 = scalar_lea.sflag [#allocation4], 1
    %572 = vsyncpa %s571, 1
    %573 = vsyncpa [#allocation7], 1
    %574 = vsyncpa [#allocation5], 1
    %s575 = scalar_lea.sflag [#allocation5], 1
    %576 = vsyncpa %s575, 1

// kernel: tpu_custom_call.1
$region0: #{tpu_custom_call.1}
  #allocation0 [shape = 'u32[]', space=smem, size = 0x4, offset = 0x4, fixed_abs, tag = 'smem constant byte address 0x4 - core index']
  #allocation1 [shape = 'u32[144,128]{1,0:T(1,128)}', space=vmem, size = 0x12000, scoped, tag = 'internal scratch']
  #allocation2 [shape = 'f32[16,128]{1,0:T(8,128)}', space=vmem, size = 0x2000, scoped, tag = 'scratch operand']
  %s0 = inlined_call_operand.hbm [shape: f32[32,256], index: 0, kind: input, shape index: {}]
  %s1 = inlined_call_operand.hbm [shape: f32[256,128], index: 1, kind: input, shape index: {}]
  %s2 = inlined_call_operand.vmem [shape: f32[1,128], index: 2, kind: input, shape index: {}]
  %s3 = inlined_call_operand.hbm [shape: f32[32,128], index: 3, kind: input, shape index: {}]
  %s4 = inlined_call_operand.vmem [shape: f32[1,128], index: 4, kind: input, shape index: {}]
  %s5 = inlined_call_operand.vmem [shape: f32[1,128], index: 5, kind: input, shape index: {}]
  %s6 = inlined_call_operand.hbm [shape: f32[32,128], index: 6, kind: output, shape index: {}]
  %s7 = sld [smem:[#allocation0]]
  $region77: #{tpu_custom_call.1} parent=0
    _
  %s9 = ssub.s32 1, %s7
  %s10 = scalar_select 0, %s9, %s7
  $region1: #{tpu_custom_call.1} parent=0
    #allocation3 [shape = 'u8[32768]{0}', space=vmem, size = 0x8000, scoped, tag = 'input window, operand 0']
    #allocation4 [shape = 's32[2]{0}', space=sflag, size = 0x8, scoped, tag = 'scoped memory for tpu_custom_call.1']
    #allocation5 [shape = 's32[2]{0}', space=sflag, size = 0x8, scoped, tag = 'scoped memory for tpu_custom_call.1']
    #allocation6 [shape = 'u8[131072]{0}', space=vmem, size = 0x20000, scoped, tag = 'input window, operand 1, single buffered']
    #allocation7 [shape = 's32[1]{0}', space=sflag, size = 0x4, scoped, tag = 'scoped memory for tpu_custom_call.1']
    #allocation8 [shape = 'u8[16384]{0}', space=vmem, size = 0x4000, scoped, tag = 'input window, operand 3']
    #allocation9 [shape = 'u8[16384]{0}', space=vmem, size = 0x4000, scoped, tag = 'output window, operand 0']
    %11 = vsyncpa [#allocation4], 0
    %s12 = scalar_lea.sflag [#allocation4], 1
    %13 = vsyncpa %s12, 0
    %14 = vsyncpa [#allocation7], 0
    %15 = vsyncpa [#allocation5], 0
    %s16 = scalar_lea.sflag [#allocation5], 1
    %17 = vsyncpa %s16, 0
    loop: start=0, step=1, limit=4
    $region2: #{tpu_custom_call.1} parent=1 // loop_pre_header
      _
    $region3: #{tpu_custom_call.1} parent=1 // loop_header
      %s19 = sphi 0, %s23
      %p20 = scmp.ge.s32.totalorder %s19, 4
      %s26 = sphi 0, %s38
      %s27 = sphi 0, %s34
      %s28 = sphi 0, %s26
      %s29 = sphi 0, %s27
      %s30 = sphi 0, %s28
      %s31 = sphi 0, %s29
      %s43 = sphi 0, %s45
      %s46 = sphi 0, %s43
      %s47 = sphi 0, %s46
      %s63 = sphi 0, %s47
      %s69 = sphi 0, %s71
      %s72 = sphi 0, %s69
      %s73 = sphi 0, %s72
      %s89 = sphi 0, %s73
      %s93 = sphi 0, %s93
      %s95 = sphi 0, %s93
      %s96 = sphi 0, %s95
      %s110 = sphi 0, %s96
      %s116 = sphi 0, %s118
      %s119 = sphi 0, %s116
      %s120 = sphi 0, %s119
      %s136 = sphi 0, %s120
      %s140 = sphi 0, %s140
      %s142 = sphi 0, %s140
      %s143 = sphi 0, %s142
      %s157 = sphi 0, %s143
      %s161 = sphi 0, %s161
      %s163 = sphi 0, %s161
      %s164 = sphi 0, %s163
      %s178 = sphi 0, %s164
      %s184 = sphi 0, %s186
      %s187 = sphi 0, %s184
      %s188 = sphi 0, %s187
      %s204 = sphi 0, %s188
    $region4: #{tpu_custom_call.1} parent=1 // loop_header_branch
      %22 = sbr.rel (%p20) target = $region8
    $region5: #{tpu_custom_call.1} parent=1 // loop_body
      %s24 = ssub.s32 %s19, 1
      %s25 = ssub.s32 %s19, 2
      %s32 = sadd.s32 1, %s27
      %p33 = scmp.ge.s32.totalorder %s32, 1
      %s34 = scalar_select %p33, 0, %s32
      %s35 = sadd.s32 1, %s26
      %s36 = scalar_select %p33, %s35, %s26
      %p37 = scmp.ge.s32.totalorder %s36, 2
      %s38 = scalar_select %p37, 0, %s36
      %s39 = ssub.s32 %s26, %s38
      %s40 = ssub.s32 %s27, %s34
      %s41 = sor.u32 %s39, %s40
      %p42 = scmp.eq.s32.totalorder %s41, 0
      %s44 = sadd.s32 %s43, 1
      %s45 = scalar_select %p42, %s43, %s44
      %p48 = pneg %p42
      %p49 = scmp.eq.s32.totalorder %s19, 1
      %p50 = por %p48, %p49
      %p51 = scmp.ne.s32.totalorder %s43, %s46
      %p52 = scmp.eq.s32.totalorder %s19, 0
      %p53 = por %p51, %p52
      %p54 = scmp.ne.s32.totalorder %s43, %s46
      %p55 = scmp.eq.s32.totalorder %s24, 1
      %p56 = por %p54, %p55
      %p57 = scmp.ne.s32.totalorder %s46, %s47
      %p58 = scmp.eq.s32.totalorder %s24, 0
      %p59 = por %p57, %p58
      %p60 = scmp.ne.s32.totalorder %s46, %s47
      %p61 = scmp.eq.s32.totalorder %s25, 1
      %p62 = por %p60, %p61
      %p64 = scmp.ne.s32.totalorder %s47, %s63
      %p65 = scmp.eq.s32.totalorder %s25, 0
      %p66 = por %p64, %p65
      %s67 = ssub.s32 %s27, %s34
      %p68 = scmp.eq.s32.totalorder %s67, 0
      %s70 = sadd.s32 %s69, 1
      %s71 = scalar_select %p68, %s69, %s70
      %p74 = pneg %p68
      %p75 = scmp.eq.s32.totalorder %s19, 1
      %p76 = por %p74, %p75
      %p77 = scmp.ne.s32.totalorder %s69, %s72
      %p78 = scmp.eq.s32.totalorder %s19, 0
      %p79 = por %p77, %p78
      %p80 = scmp.ne.s32.totalorder %s69, %s72
      %p81 = scmp.eq.s32.totalorder %s24, 1
      %p82 = por %p80, %p81
      %p83 = scmp.ne.s32.totalorder %s72, %s73
      %p84 = scmp.eq.s32.totalorder %s24, 0
      %p85 = por %p83, %p84
      %p86 = scmp.ne.s32.totalorder %s72, %s73
      %p87 = scmp.eq.s32.totalorder %s25, 1
      %p88 = por %p86, %p87
      %p90 = scmp.ne.s32.totalorder %s73, %s89
      %p91 = scmp.eq.s32.totalorder %s25, 0
      %p92 = por %p90, %p91
      %s94 = sadd.s32 %s93, 1
      %p97 = scmp.eq.s32.totalorder %s19, 1
      %p98 = scmp.ne.s32.totalorder %s93, %s95
      %p99 = scmp.eq.s32.totalorder %s19, 0
      %p100 = por %p98, %p99
      %p101 = scmp.ne.s32.totalorder %s93, %s95
      %p102 = scmp.eq.s32.totalorder %s24, 1
      %p103 = por %p101, %p102
      %p104 = scmp.ne.s32.totalorder %s95, %s96
      %p105 = scmp.eq.s32.totalorder %s24, 0
      %p106 = por %p104, %p105
      %p107 = scmp.ne.s32.totalorder %s95, %s96
      %p108 = scmp.eq.s32.totalorder %s25, 1
      %p109 = por %p107, %p108
      %p111 = scmp.ne.s32.totalorder %s96, %s110
      %p112 = scmp.eq.s32.totalorder %s25, 0
      %p113 = por %p111, %p112
      %s114 = ssub.s32 %s26, %s38
      %p115 = scmp.eq.s32.totalorder %s114, 0
      %s117 = sadd.s32 %s116, 1
      %s118 = scalar_select %p115, %s116, %s117
      %p121 = pneg %p115
      %p122 = scmp.eq.s32.totalorder %s19, 1
      %p123 = por %p121, %p122
      %p124 = scmp.ne.s32.totalorder %s116, %s119
      %p125 = scmp.eq.s32.totalorder %s19, 0
      %p126 = por %p124, %p125
      %p127 = scmp.ne.s32.totalorder %s116, %s119
      %p128 = scmp.eq.s32.totalorder %s24, 1
      %p129 = por %p127, %p128
      %p130 = scmp.ne.s32.totalorder %s119, %s120
      %p131 = scmp.eq.s32.totalorder %s24, 0
      %p132 = por %p130, %p131
      %p133 = scmp.ne.s32.totalorder %s119, %s120
      %p134 = scmp.eq.s32.totalorder %s25, 1
      %p135 = por %p133, %p134
      %p137 = scmp.ne.s32.totalorder %s120, %s136
      %p138 = scmp.eq.s32.totalorder %s25, 0
      %p139 = por %p137, %p138
      %s141 = sadd.s32 %s140, 1
      %p144 = scmp.eq.s32.totalorder %s19, 1
      %p145 = scmp.ne.s32.totalorder %s140, %s142
      %p146 = scmp.eq.s32.totalorder %s19, 0
      %p147 = por %p145, %p146
      %p148 = scmp.ne.s32.totalorder %s140, %s142
      %p149 = scmp.eq.s32.totalorder %s24, 1
      %p150 = por %p148, %p149
      %p151 = scmp.ne.s32.totalorder %s142, %s143
      %p152 = scmp.eq.s32.totalorder %s24, 0
      %p153 = por %p151, %p152
      %p154 = scmp.ne.s32.totalorder %s142, %s143
      %p155 = scmp.eq.s32.totalorder %s25, 1
      %p156 = por %p154, %p155
      %p158 = scmp.ne.s32.totalorder %s143, %s157
      %p159 = scmp.eq.s32.totalorder %s25, 0
      %p160 = por %p158, %p159
      %s162 = sadd.s32 %s161, 1
      %p165 = scmp.eq.s32.totalorder %s19, 1
      %p166 = scmp.ne.s32.totalorder %s161, %s163
      %p167 = scmp.eq.s32.totalorder %s19, 0
      %p168 = por %p166, %p167
      %p169 = scmp.ne.s32.totalorder %s161, %s163
      %p170 = scmp.eq.s32.totalorder %s24, 1
      %p171 = por %p169, %p170
      %p172 = scmp.ne.s32.totalorder %s163, %s164
      %p173 = scmp.eq.s32.totalorder %s24, 0
      %p174 = por %p172, %p173
      %p175 = scmp.ne.s32.totalorder %s163, %s164
      %p176 = scmp.eq.s32.totalorder %s25, 1
      %p177 = por %p175, %p176
      %p179 = scmp.ne.s32.totalorder %s164, %s178
      %p180 = scmp.eq.s32.totalorder %s25, 0
      %p181 = por %p179, %p180
      %s182 = ssub.s32 %s26, %s38
      %p183 = scmp.eq.s32.totalorder %s182, 0
      %s185 = sadd.s32 %s184, 1
      %s186 = scalar_select %p183, %s184, %s185
      %p189 = pneg %p183
      %p190 = scmp.eq.s32.totalorder %s19, 1
      %p191 = por %p189, %p190
      %p192 = scmp.ne.s32.totalorder %s184, %s187
      %p193 = scmp.eq.s32.totalorder %s19, 0
      %p194 = por %p192, %p193
      %p195 = scmp.ne.s32.totalorder %s184, %s187
      %p196 = scmp.eq.s32.totalorder %s24, 1
      %p197 = por %p195, %p196
      %p198 = scmp.ne.s32.totalorder %s187, %s188
      %p199 = scmp.eq.s32.totalorder %s24, 0
      %p200 = por %p198, %p199
      %p201 = scmp.ne.s32.totalorder %s187, %s188
      %p202 = scmp.eq.s32.totalorder %s25, 1
      %p203 = por %p201, %p202
      %p205 = scmp.ne.s32.totalorder %s188, %s204
      %p206 = scmp.eq.s32.totalorder %s25, 0
      %p207 = por %p205, %p206
      %p208 = scmp.le.s32.totalorder 1, %s19
      %p209 = scmp.lt.s32.totalorder %s19, 3
      %p210 = pnand %p208, %p209
      %p211 = pneg %p210
      // Predicated region
      $region9: #{tpu_custom_call.1} parent=5 // pred_check
        _
      $region10: #{tpu_custom_call.1} parent=5 // pred_check_branch
        %213 = sbr.rel (%p210) target = $region12
      $region11: #{tpu_custom_call.1} parent=5 // pred_region
        %s214 = ssub.s32 %s19, 1
        // Predicated region
        $region13: #{tpu_custom_call.1} parent=11 // pred_check
          %p215 = pneg %p85
        $region14: #{tpu_custom_call.1} parent=11 // pred_check_branch
          %217 = sbr.rel (%p215) target = $region16
        $region15: #{tpu_custom_call.1} parent=11 // pred_region
          %s218 = smul.u32 32, %s29
          %s220 = ssub.s32 4096, 4096
          %221 = vsyncadd [#allocation7], %s220
          %s222 = smul.addr %s218, 128
          %s223 = scalar_lea.hbm %s1, %s222
          %s224 = sshll.u32 [#allocation6], 4
          %s225 = int_to_ptr.vmem [resolvable:$true] %s224
          %230 = dma.hbm_to_vmem [thread:$0]  %s223, 4096, %s225, [#allocation7], 128, 128, 8
        $region16: #{tpu_custom_call.1} parent=11 // pred_fallthru
          _
        // Predicated region
        $region17: #{tpu_custom_call.1} parent=11 // pred_check
          %p231 = pneg %p106
        $region18: #{tpu_custom_call.1} parent=11 // pred_check_branch
          %233 = sbr.rel (%p231) target = $region20
        $region19: #{tpu_custom_call.1} parent=11 // pred_region
          _
        $region20: #{tpu_custom_call.1} parent=11 // pred_fallthru
          _
        // Predicated region
        $region21: #{tpu_custom_call.1} parent=11 // pred_check
          %p234 = pneg %p153
        $region22: #{tpu_custom_call.1} parent=11 // pred_check_branch
          %236 = sbr.rel (%p234) target = $region24
        $region23: #{tpu_custom_call.1} parent=11 // pred_region
          _
        $region24: #{tpu_custom_call.1} parent=11 // pred_fallthru
          _
        // Predicated region
        $region25: #{tpu_custom_call.1} parent=11 // pred_check
          %p237 = pneg %p174
        $region26: #{tpu_custom_call.1} parent=11 // pred_check_branch
          %239 = sbr.rel (%p237) target = $region28
        $region27: #{tpu_custom_call.1} parent=11 // pred_region
          _
        $region28: #{tpu_custom_call.1} parent=11 // pred_fallthru
          _
      $region12: #{tpu_custom_call.1} parent=5 // pred_fallthru
        _
      %p240 = scmp.lt.s32.totalorder %s19, 2
      // Predicated region
      $region29: #{tpu_custom_call.1} parent=5 // pred_check
        %p241 = pneg %p240
      $region30: #{tpu_custom_call.1} parent=5 // pred_check_branch
        %243 = sbr.rel (%p241) target = $region32
      $region31: #{tpu_custom_call.1} parent=5 // pred_region
        // Predicated region
        $region33: #{tpu_custom_call.1} parent=31 // pred_check
          %p244 = pneg %p53
        $region34: #{tpu_custom_call.1} parent=31 // pred_check_branch
          %246 = sbr.rel (%p244) target = $region36
        $region35: #{tpu_custom_call.1} parent=31 // pred_region
          %s247 = sand.u32 %s19, 1
          %s248 = scalar_lea.sflag [#allocation4], %s247
          %s249 = sand.u32 %s43, 1
          %s250 = smul.addr %s249, 32
          %s251 = scalar_lea.vmem [#allocation3], %s250
          %s252 = smul.u32 2, %s26
          %s253 = smul.u32 2, %s27
          %s255 = ssub.s32 512, 512
          %256 = vsyncadd %s248, %s255
          %s257 = smul.addr %s252, 2
          %s258 = sadd.s32 %s253, %s257
          %s259 = smul.addr %s258, 128
          %s260 = scalar_lea.hbm %s0, %s259
          %s261 = sshll.u32 %s251, 4
          %s262 = int_to_ptr.vmem [resolvable:$true] %s261
          %267 = dma.hbm_to_vmem [thread:$0]  %s260, 512, %s262, %s248, 256, 256, 16
        $region36: #{tpu_custom_call.1} parent=31 // pred_fallthru
          _
        // Predicated region
        $region37: #{tpu_custom_call.1} parent=31 // pred_check
          %p268 = pneg %p126
        $region38: #{tpu_custom_call.1} parent=31 // pred_check_branch
          %270 = sbr.rel (%p268) target = $region40
        $region39: #{tpu_custom_call.1} parent=31 // pred_region
          %s271 = sand.u32 %s19, 1
          %s272 = scalar_lea.sflag [#allocation4], %s271
          %s273 = sand.u32 %s116, 1
          %s274 = smul.addr %s273, 16
          %s275 = scalar_lea.vmem [#allocation8], %s274
          %s276 = smul.u32 2, %s26
          %s278 = ssub.s32 256, 256
          %279 = vsyncadd %s272, %s278
          %s280 = smul.addr %s276, 128
          %s281 = scalar_lea.hbm %s3, %s280
          %s282 = sshll.u32 %s275, 4
          %s283 = int_to_ptr.vmem [resolvable:$true] %s282
          %288 = dma.hbm_to_vmem [thread:$0]  %s281, 256, %s283, %s272, 128, 128, 8
        $region40: #{tpu_custom_call.1} parent=31 // pred_fallthru
          _
      $region32: #{tpu_custom_call.1} parent=5 // pred_fallthru
        _
      %p289 = scmp.le.s32.totalorder 1, %s19
      %p290 = scmp.lt.s32.totalorder %s19, 3
      %p291 = pnand %p289, %p290
      %p292 = pneg %p291
      // Predicated region
      $region41: #{tpu_custom_call.1} parent=5 // pred_check
        _
      $region42: #{tpu_custom_call.1} parent=5 // pred_check_branch
        %294 = sbr.rel (%p291) target = $region44
      $region43: #{tpu_custom_call.1} parent=5 // pred_region
        %s295 = ssub.s32 %s19, 1
        %s296 = sand.u32 %s24, 1
        %s297 = scalar_lea.sflag [#allocation4], %s296
        %s298 = sand.u32 %s46, 1
        %s299 = smul.addr %s298, 32
        %s300 = scalar_lea.vmem [#allocation3], %s299
        // Predicated region
        $region45: #{tpu_custom_call.1} parent=43 // pred_check
          %p301 = pneg %p59
        $region46: #{tpu_custom_call.1} parent=43 // pred_check_branch
          %303 = sbr.rel (%p301) target = $region48
        $region47: #{tpu_custom_call.1} parent=43 // pred_region
          %304 = dma.done %s297, 512
        $region48: #{tpu_custom_call.1} parent=43 // pred_fallthru
          _
        // Predicated region
        $region49: #{tpu_custom_call.1} parent=43 // pred_check
          %p305 = pneg %p85
        $region50: #{tpu_custom_call.1} parent=43 // pred_check_branch
          %307 = sbr.rel (%p305) target = $region52
        $region51: #{tpu_custom_call.1} parent=43 // pred_region
          %308 = dma.done [#allocation7], 4096
        $region52: #{tpu_custom_call.1} parent=43 // pred_fallthru
          _
        %s309 = sand.u32 %s24, 1
        %s310 = scalar_lea.sflag [#allocation4], %s309
        %s311 = sand.u32 %s119, 1
        %s312 = smul.addr %s311, 16
        %s313 = scalar_lea.vmem [#allocation8], %s312
        // Predicated region
        $region53: #{tpu_custom_call.1} parent=43 // pred_check
          %p314 = pneg %p132
        $region54: #{tpu_custom_call.1} parent=43 // pred_check_branch
          %316 = sbr.rel (%p314) target = $region56
        $region55: #{tpu_custom_call.1} parent=43 // pred_region
          %317 = dma.done %s310, 256
        $region56: #{tpu_custom_call.1} parent=43 // pred_fallthru
          _
        %s318 = sand.u32 %s24, 1
        %s319 = scalar_lea.sflag [#allocation4], %s318
        %s320 = sand.u32 %s46, 1
        %s321 = smul.addr %s320, 32
        %s322 = scalar_lea.vmem [#allocation3], %s321
        %p323 = pneg %p59
        %p324 = pneg %p56
        %p325 = pneg %p85
        %p326 = pneg %p82
        %p327 = pneg %p106
        %p328 = pneg %p103
        %s329 = sand.u32 %s24, 1
        %s330 = scalar_lea.sflag [#allocation4], %s329
        %s331 = sand.u32 %s119, 1
        %s332 = smul.addr %s331, 16
        %s333 = scalar_lea.vmem [#allocation8], %s332
        %p334 = pneg %p132
        %p335 = pneg %p129
        %p336 = pneg %p153
        %p337 = pneg %p150
        %p338 = pneg %p174
        %p339 = pneg %p171
        %p340 = pneg %p200
        %p341 = pneg %p197
        %s342 = sand.u32 %s187, 1
        %s343 = scalar_lea.sflag [#allocation5], %s342
        %s344 = sand.u32 %s187, 1
        %s345 = smul.addr %s344, 16
        %s346 = scalar_lea.vmem [#allocation9], %s345
        %s347 = smul.u32 2, %s28
        %s348 = smul.u32 2, %s29
        %s349 = smul.u32 32, %s29
        %s350 = smul.u32 2, %s28
        %s351 = smul.u32 2, %s28
        %p352 = scmp.eq.s32.totalorder %s29, 0
        // Predicated region
        $region57: #{tpu_custom_call.1} parent=43 // pred_check
          %p353 = pneg %p352
        $region58: #{tpu_custom_call.1} parent=43 // pred_check_branch
          %355 = sbr.rel (%p353) target = $region60
        $region59: #{tpu_custom_call.1} parent=43 // pred_region
          %356 = vst [vmem:[#allocation2] sm:$0xff] 0.0
          %357 = vst [vmem:[#allocation2 + $0x8] sm:$0xff] 0.0
        $region60: #{tpu_custom_call.1} parent=43 // pred_fallthru
          _
        %v358 = vld [vmem:[#allocation2] sm:$0xff]
        %v359 = vld [vmem:[#allocation2 + $0x8] sm:$0xff]
        %v360 = vld [vmem:[%s300] sm:$0xff]
        %v361 = vld [vmem:[%s300 + $0x8] sm:$0xff]
        %v362 = vld [vmem:[%s300 + $0x10] sm:$0xff]
        %v363 = vld [vmem:[%s300 + $0x18] sm:$0xff]
        %v364 = vld [vmem:[#allocation6] sm:$0xff]
        %v365 = vld [vmem:[#allocation6 + $0x8] sm:$0xff]
        %v366 = vld [vmem:[#allocation6 + $0x10] sm:$0xff]
        %v367 = vld [vmem:[#allocation6 + $0x18] sm:$0xff]
        %v368 = vld [vmem:[#allocation6 + $0x20] sm:$0xff]
        %v369 = vld [vmem:[#allocation6 + $0x28] sm:$0xff]
        %v370 = vld [vmem:[#allocation6 + $0x30] sm:$0xff]
        %v371 = vld [vmem:[#allocation6 + $0x38] sm:$0xff]
        %v372 = vld [vmem:[#allocation6 + $0x40] sm:$0xff]
        %v373 = vld [vmem:[#allocation6 + $0x48] sm:$0xff]
        %v374 = vld [vmem:[#allocation6 + $0x50] sm:$0xff]
        %v375 = vld [vmem:[#allocation6 + $0x58] sm:$0xff]
        %v376 = vld [vmem:[#allocation6 + $0x60] sm:$0xff]
        %v377 = vld [vmem:[#allocation6 + $0x68] sm:$0xff]
        %v378 = vld [vmem:[#allocation6 + $0x70] sm:$0xff]
        %v379 = vld [vmem:[#allocation6 + $0x78] sm:$0xff]
        %v380 = vld [vmem:[#allocation6 + $0x80] sm:$0xff]
        %v381 = vld [vmem:[#allocation6 + $0x88] sm:$0xff]
        %v382 = vld [vmem:[#allocation6 + $0x90] sm:$0xff]
        %v383 = vld [vmem:[#allocation6 + $0x98] sm:$0xff]
        %v384 = vld [vmem:[#allocation6 + $0xa0] sm:$0xff]
        %v385 = vld [vmem:[#allocation6 + $0xa8] sm:$0xff]
        %v386 = vld [vmem:[#allocation6 + $0xb0] sm:$0xff]
        %v387 = vld [vmem:[#allocation6 + $0xb8] sm:$0xff]
        %v388 = vld [vmem:[#allocation6 + $0xc0] sm:$0xff]
        %v389 = vld [vmem:[#allocation6 + $0xc8] sm:$0xff]
        %v390 = vld [vmem:[#allocation6 + $0xd0] sm:$0xff]
        %v391 = vld [vmem:[#allocation6 + $0xd8] sm:$0xff]
        %v392 = vld [vmem:[#allocation6 + $0xe0] sm:$0xff]
        %v393 = vld [vmem:[#allocation6 + $0xe8] sm:$0xff]
        %v394 = vld [vmem:[#allocation6 + $0xf0] sm:$0xff]
        %v395 = vld [vmem:[#allocation6 + $0xf8] sm:$0xff]
        %396 = vmatprep.subr.mxu0 0.0
        %397 = vmatpush1.msra.mxu0 %v364
        %398 = vmatprep.subr.mxu0 0.0
        %399 = vmatpush1.msra.mxu0 %v365
        %400 = vmatprep.subr.mxu0 0.0
        %401 = vmatpush1.msra.mxu0 %v366
        %402 = vmatprep.subr.mxu0 0.0
        %403 = vmatpush1.msra.mxu0 %v367
        %404 = vmatprep.subr.mxu0 0.0
        %405 = vmatpush1.msra.mxu0 %v368
        %406 = vmatprep.subr.mxu0 0.0
        %407 = vmatpush1.msra.mxu0 %v369
        %408 = vmatprep.subr.mxu0 0.0
        %409 = vmatpush1.msra.mxu0 %v370
        %410 = vmatprep.subr.mxu0 0.0
        %411 = vmatpush1.msra.mxu0 %v371
        %412 = vmatprep.subr.mxu0 0.0
        %413 = vmatpush1.msra.mxu0 %v372
        %414 = vmatprep.subr.mxu0 0.0
        %415 = vmatpush1.msra.mxu0 %v373
        %416 = vmatprep.subr.mxu0 0.0
        %417 = vmatpush1.msra.mxu0 %v374
        %418 = vmatprep.subr.mxu0 0.0
        %419 = vmatpush1.msra.mxu0 %v375
        %420 = vmatprep.subr.mxu0 0.0
        %421 = vmatpush1.msra.mxu0 %v376
        %422 = vmatprep.subr.mxu0 0.0
        %423 = vmatpush1.msra.mxu0 %v377
        %424 = vmatprep.subr.mxu0 0.0
        %425 = vmatpush1.msra.mxu0 %v378
        %426 = vmatprep.subr.mxu0 0.0
        %427 = vmatpush1.msra.mxu0 %v379
        %428 = vmatprep.subr.mxu0 0.0
        %429 = vmatpush1.msra.mxu0 %v380
        %430 = vmatprep.subr.mxu0 0.0
        %431 = vmatpush1.msra.mxu0 %v381
        %432 = vmatprep.subr.mxu0 0.0
        %433 = vmatpush1.msra.mxu0 %v382
        %434 = vmatprep.subr.mxu0 0.0
        %435 = vmatpush1.msra.mxu0 %v383
        %436 = vmatprep.subr.mxu0 0.0
        %437 = vmatpush1.msra.mxu0 %v384
        %438 = vmatprep.subr.mxu0 0.0
        %439 = vmatpush1.msra.mxu0 %v385
        %440 = vmatprep.subr.mxu0 0.0
        %441 = vmatpush1.msra.mxu0 %v386
        %442 = vmatprep.subr.mxu0 0.0
        %443 = vmatpush1.msra.mxu0 %v387
        %444 = vmatprep.subr.mxu0 0.0
        %445 = vmatpush1.msra.mxu0 %v388
        %446 = vmatprep.subr.mxu0 0.0
        %447 = vmatpush1.msra.mxu0 %v389
        %448 = vmatprep.subr.mxu0 0.0
        %449 = vmatpush1.msra.mxu0 %v390
        %450 = vmatprep.subr.mxu0 0.0
        %451 = vmatpush1.msra.mxu0 %v391
        %452 = vmatprep.subr.mxu0 0.0
        %453 = vmatpush1.msra.mxu0 %v392
        %454 = vmatprep.subr.mxu0 0.0
        %455 = vmatpush1.msra.mxu0 %v393
        %456 = vmatprep.subr.mxu0 0.0
        %457 = vmatpush1.msra.mxu0 %v394
        %458 = vmatprep.subr.mxu0 0.0
        %459 = vmatpush1.msra.mxu0 %v395
        %460 = vmatprep.mubr.f32.mxu0 %v361
        %461 = vmatmul.mubr.f32.gmra.mrb[0].mxu0 %v360
        %v462 = vpop.f32.mrb[0].mxu0
        %v463 = vadd.f32 0.0, %v462
        %v464 = vpop.f32.mrb[0].mxu0
        %465 = vmatprep.mubr.f32.mxu0 %v363
        %466 = vmatmul.mubr.f32.gmra.mrb[0].mxu0 %v362
        %v467 = vpop.f32.mrb[0].mxu0
        %v468 = vadd.f32 0.0, %v467
        %v469 = vpop.f32.mrb[0].mxu0
        %470 = vdwg.mxu0
        %v471 = vadd.f32 %v358, %v463
        %v472 = vadd.f32 %v359, %v468
        %473 = vst [vmem:[#allocation2] sm:$0xff] %v471
        %474 = vst [vmem:[#allocation2 + $0x8] sm:$0xff] %v472
        // Predicated region
        $region61: #{tpu_custom_call.1} parent=43 // pred_check
          %p475 = pneg %p352
        $region62: #{tpu_custom_call.1} parent=43 // pred_check_branch
          %477 = sbr.rel (%p475) target = $region64
        $region63: #{tpu_custom_call.1} parent=43 // pred_region
          %v478 = vld [vmem:[#allocation2] sm:$0xff]
          %v479 = vld [vmem:[#allocation2 + $0x8] sm:$0xff]
          %v480 = vld [vmem:[%s2] sm:$0x1]
          %v482 = vlaneseq
          %v483 = vshrl.u32 %v482, 7
          %v484 = vsub.s32 0, %v483
          %v485 = vrot.slane %v480, %v484
          %v487 = vadd.f32 %v478, %v485
          %v488 = vadd.f32 %v479, %v485
          %v489 = vld [vmem:[%s313] sm:$0xff]
          %v490 = vld [vmem:[%s313 + $0x8] sm:$0xff]
          %v491 = vadd.f32 %v487, %v489
          %v492 = vadd.f32 %v488, %v490
          %493 = vadd.xlane.f32.xlu0 %v491
          %v494 = vpop.xlane.xlu0 %493
          %495 = vadd.xlane.f32.xlu0 %v492
          %v496 = vpop.xlane.xlu0 %495
          %v497 = vmul.f32 %v494, 0.0078125
          %v498 = vmul.f32 %v496, 0.0078125
          %v499 = vsub.f32 %v491, %v497
          %v500 = vsub.f32 %v492, %v498
          %v501 = vmul.f32 %v499, %v499
          %v502 = vmul.f32 %v500, %v500
          %503 = vadd.xlane.f32.xlu0 %v501
          %v504 = vpop.xlane.xlu0 %503
          %505 = vadd.xlane.f32.xlu0 %v502
          %v506 = vpop.xlane.xlu0 %505
          %v507 = vmul.f32 %v504, 0.0078125
          %v508 = vmul.f32 %v506, 0.0078125
          %v509 = vadd.f32 %v507, 1e-12
          %v510 = vadd.f32 %v508, 1e-12
          %v511 = vrsqrt.pop %v509
          %v512 = vrsqrt.pop %v510
          %v513 = vmul.f32 %v499, %v511
          %v514 = vmul.f32 %v500, %v512
          %v515 = vld [vmem:[%s4] sm:$0x1]
          %v517 = vlaneseq
          %v518 = vshrl.u32 %v517, 7
          %v519 = vsub.s32 0, %v518
          %v520 = vrot.slane %v515, %v519
          %v522 = vmul.f32 %v513, %v520
          %v523 = vmul.f32 %v514, %v520
          %v524 = vld [vmem:[%s5] sm:$0x1]
          %v526 = vlaneseq
          %v527 = vshrl.u32 %v526, 7
          %v528 = vsub.s32 0, %v527
          %v529 = vrot.slane %v524, %v528
          %v531 = vadd.f32 %v522, %v529
          %v532 = vadd.f32 %v523, %v529
          %533 = vst [vmem:[%s346] sm:$0xff] %v531
          %534 = vst [vmem:[%s346 + $0x8] sm:$0xff] %v532
        $region64: #{tpu_custom_call.1} parent=43 // pred_fallthru
          _
        %s535 = sand.u32 %s187, 1
        %s536 = scalar_lea.sflag [#allocation5], %s535
        %s537 = sand.u32 %s187, 1
        %s538 = smul.addr %s537, 16
        %s539 = scalar_lea.vmem [#allocation9], %s538
        // Predicated region
        $region65: #{tpu_custom_call.1} parent=43 // pred_check
          %p540 = pneg %p197
        $region66: #{tpu_custom_call.1} parent=43 // pred_check_branch
          %542 = sbr.rel (%p540) target = $region68
        $region67: #{tpu_custom_call.1} parent=43 // pred_region
          %s543 = smul.u32 2, %s28
          %s545 = ssub.s32 256, 256
          %546 = vsyncadd %s536, %s545
          %s547 = smul.addr %s543, 128
          %s548 = scalar_lea.hbm %s6, %s547
          %s549 = sshll.u32 %s539, 4
          %s550 = int_to_ptr.vmem [resolvable:$true] %s549
          %555 = dma.vmem_to_hbm [thread:$0]  %s550, 256, %s548, %s536, 128, 128, 8
        $region68: #{tpu_custom_call.1} parent=43 // pred_fallthru
          _
      $region44: #{tpu_custom_call.1} parent=5 // pred_fallthru
        _
      %p556 = scmp.le.s32.totalorder 2, %s19
      // Predicated region
      $region69: #{tpu_custom_call.1} parent=5 // pred_check
        %p557 = pneg %p556
      $region70: #{tpu_custom_call.1} parent=5 // pred_check_branch
        %559 = sbr.rel (%p557) target = $region72
      $region71: #{tpu_custom_call.1} parent=5 // pred_region
        %s560 = ssub.s32 %s19, 2
        // Predicated region
        $region73: #{tpu_custom_call.1} parent=71 // pred_check
          %p561 = pneg %p203
        $region74: #{tpu_custom_call.1} parent=71 // pred_check_branch
          %563 = sbr.rel (%p561) target = $region76
        $region75: #{tpu_custom_call.1} parent=71 // pred_region
          %s564 = sand.u32 %s188, 1
          %s565 = scalar_lea.sflag [#allocation5], %s564
          %s566 = sand.u32 %s188, 1
          %s567 = smul.addr %s566, 16
          %s568 = scalar_lea.vmem [#allocation9], %s567
          %569 = dma.done %s565, 256
        $region76: #{tpu_custom_call.1} parent=71 // pred_fallthru
          _
      $region72: #{tpu_custom_call.1} parent=5 // pred_fallthru
        _
    $region6: #{tpu_custom_call.1} parent=1 // loop_footer
      %s23 = sadd.s32 1, %s19
    $region7: #{tpu_custom_call.1} parent=1 // loop_footer_branch
      %18 = sbr.rel target = $region3
    $region8: #{tpu_custom_call.1} parent=1 // loop_exit
      _
    %570 = vsyncpa [#allocation4], 1
    %s571 = scalar_lea.sflag [#allocation4], 1
    %572 = vsyncpa %s571, 1
    %573 = vsyncpa [#allocation7], 1
    %574 = vsyncpa [#allocation5], 1
    %s575 = scalar_lea.sflag [#allocation5], 1
    %576 = vsyncpa %s575, 1

</llo_original>
